<compile_context>
chip_gen: v7x
topology: tpu7x:2x2x1
jax: 0.10.0
libtpu: 0.0.40
codegen_flags: <defaults>
</compile_context>

<pallas_src>
import functools

import jax
import jax.numpy as jnp
import numpy as np
from jax import lax
from jax.experimental import pallas as pl
from jax.experimental.pallas import tpu as pltpu

CP = 128  # lane-padded coordinate width (coords live in lanes 0..2, zeros elsewhere)


def _silu(x):
    return x * jax.nn.sigmoid(x)


def _round_up(v, m):
    return ((v + m - 1) // m) * m


def _pad2(a, rows, cols):
    """Zero-pad a 2-D array up to (rows, cols)."""
    r, c = a.shape
    if r == rows and c == cols:
        return a
    return jnp.pad(a, ((0, rows - r), (0, cols - c)))


def _pick_tile(n, cap=64):
    """Largest multiple of 8 that divides n and is <= cap (n must be a multiple of 8)."""
    t = min(cap, n)
    t -= t % 8
    while n % t != 0:
        t -= 8
    return t


def _vmem_limit_bytes():
    # ~100 MiB on 128-MiB-VMEM chips (v5e/v6e), ~48 MiB on v7x (64 MiB physical).
    try:
        cap = int(pltpu.get_tpu_info().vmem_capacity_bytes)
        return int(min(max(cap - 16 * 1024 * 1024, 32 * 1024 * 1024),
                       100 * 1024 * 1024))
    except Exception:
        return 48 * 1024 * 1024


def _egcl_kernel(x_dst_ref, x_src_ref, hh_dst_ref, hh_src_ref,
                 w1r_ref, w1s_ref, w1d_ref, b1_ref,
                 w2_ref, b2_ref,
                 wc1_ref, bc1_ref, wc2_ref,
                 wn1h_ref, wn1e_ref, bn1_ref, wn2_ref, bn2_ref,
                 coord_ref, h_ref,
                 edge_acc_ref, trans_acc_ref, dst_proj_ref,
                 *, n_nodes, residual, normalize, tanh, mxu_dtype, eps=1e-8):
    TN = x_dst_ref.shape[0]          # destination tile size
    TS = x_src_ref.shape[0]          # source tile size (reduction axis)
    Hp = w2_ref.shape[0]             # lane-padded hidden width

    j = pl.program_id(0)             # destination tile index ("parallel")
    k = pl.program_id(1)             # source tile index ("arbitrary", reduction)

    hh_dst = hh_dst_ref[...]         # [TN, Fp]  f32 (zero padded)

    @pl.when(k == 0)
    def _init():
        edge_acc_ref[...] = jnp.zeros_like(edge_acc_ref)
        trans_acc_ref[...] = jnp.zeros_like(trans_acc_ref)
        # dst-side edge_mlp projection depends only on the dst tile: compute once,
        # reuse for every source tile of the reduction.
        dst_proj_ref[...] = (jnp.dot(hh_dst.astype(mxu_dtype), w1d_ref[...],
                                     preferred_element_type=jnp.float32)
                             + b1_ref[...])

    x_dst = x_dst_ref[...]           # [TN, CP]  f32 (coords in lanes 0..2)
    x_src = x_src_ref[...]           # [TS, CP]  f32
    hh_src = hh_src_ref[...]         # [TS, Fp]  f32

    # Geometry in f32, lane-dense, directly in the sublane-major [TS, TN, c] layout.
    diff = x_src[:, None, :] - x_dst[None, :, :]              # [TS, TN, CP]
    radial = jnp.sum(diff * diff, axis=-1, keepdims=True)     # [TS, TN, 1], >= 0 exactly

    # Self-edge mask (complete graph without self loops) — only needed for the
    # edge-feature sum (diff is exactly zero on the diagonal).
    src_ids = lax.broadcasted_iota(jnp.int32, (TS, TN, 1), 0) + k * TS
    dst_ids = lax.broadcasted_iota(jnp.int32, (TS, TN, 1), 1) + j * TN
    mask = (src_ids != dst_ids).astype(jnp.float32)           # [TS, TN, 1]

    # ---- edge_mlp layer 1: cat(radial, hh_src, hh_dst) @ W1 + b1, decomposed so
    # the concat never materializes.  MXU operands in bf16, f32 accumulation. ----
    src_proj = jnp.dot(hh_src.astype(mxu_dtype), w1s_ref[...],
                       preferred_element_type=jnp.float32)                  # [TS, Hp]
    e1 = (radial * w1r_ref[...][None, :, :]
          + src_proj[:, None, :] + dst_proj_ref[...][None, :, :])           # [TS, TN, Hp]
    e1 = _silu(e1).reshape(TS * TN, Hp)        # free sublane merge (TN % 8 == 0)

    # ---- edge_mlp layer 2 ----
    e2 = _silu(jnp.dot(e1.astype(mxu_dtype), w2_ref[...],
                       preferred_element_type=jnp.float32) + b2_ref[...])   # [TS*TN, Hp]

    # ---- coord_mlp: Linear + SiLU + Linear(H -> 1, no bias) as a lane reduce ----
    c1 = _silu(jnp.dot(e2.astype(mxu_dtype), wc1_ref[...],
                       preferred_element_type=jnp.float32) + bc1_ref[...])  # [TS*TN, Hp]
    s = jnp.sum(c1 * wc2_ref[...], axis=-1, keepdims=True)                  # [TS*TN, 1]
    if tanh:
        s = jnp.tanh(s)
    s = s.reshape(TS, TN, 1)                   # free leading-dim split

    if normalize:
        inv_norm = pl.reciprocal(jnp.sqrt(radial) + eps,
                                 approx=(mxu_dtype != jnp.float32))
        diff = diff * inv_norm

    # ---- per-destination partial sums for this source tile ----
    trans_acc_ref[...] += jnp.sum(s * diff, axis=0)                         # [TN, CP]
    edge_acc_ref[...] += jnp.sum(mask * e2.reshape(TS, TN, Hp), axis=0)     # [TN, Hp]

    # ---- finalize once every source tile has been reduced ----
    @pl.when(k == pl.num_programs(1) - 1)
    def _finalize():
        inv_deg = jnp.float32(1.0 / (n_nodes - 1))   # mailbox mean over N-1 neighbors
        coord_ref[...] = x_dst + trans_acc_ref[...] * inv_deg   # padded lanes stay 0

        edge_sum = edge_acc_ref[...]
        n1 = _silu(jnp.dot(hh_dst.astype(mxu_dtype), wn1h_ref[...],
                           preferred_element_type=jnp.float32)
                   + jnp.dot(edge_sum.astype(mxu_dtype), wn1e_ref[...],
                             preferred_element_type=jnp.float32)
                   + bn1_ref[...])
        h = jnp.dot(n1.astype(mxu_dtype), wn2_ref[...],
                    preferred_element_type=jnp.float32) + bn2_ref[...]
        if residual:
            h = hh_dst + h       # padded columns are zero on both sides
        h_ref[...] = h


def e_gcl_h_forward(x, hh, params, *, tile_n=None, tile_s=None,
                    residual=True, normalize=False, tanh=False,
                    mxu_dtype=jnp.bfloat16):
    """Run the E_GCL_H forward pass with the Pallas TPU kernel.

    mxu_dtype=jnp.bfloat16 (default) uses bf16 MXU operands with f32 accumulation;
    pass jnp.float32 for a full-precision path.
    """
    N = x.shape[0]
    F = hh.shape[1]
    H = params['b1'].shape[-1]
    O = params['bn2'].shape[-1]
    assert N % 8 == 0, "number of nodes must be a multiple of 8"
    if residual:
        assert F == O, "residual connection requires input_nf == output_nf"

    Hp = _round_up(H, 128)
    Fp = _round_up(F, 128)
    Op = _round_up(O, 128)

    tile_n = _pick_tile(N) if tile_n is None else int(tile_n)
    tile_s = _pick_tile(N) if tile_s is None else int(tile_s)
    assert N % tile_n == 0 and N % tile_s == 0
    assert tile_n % 8 == 0 and tile_s % 8 == 0

    f32 = jnp.float32
    mx = mxu_dtype
    x_p = _pad2(x.astype(f32), N, CP)       # lane-dense coordinate slab
    hh_p = _pad2(hh.astype(f32), N, Fp)

    # Lane-pad weights (zero columns/rows keep the padded activations exactly 0)
    # and cast MXU operands to bf16.  Biases / VPU-side vectors stay f32.
    p = {
        'w1r':  _pad2(params['w1r'], 1, Hp).astype(f32),
        'w1s':  _pad2(params['w1s'], Fp, Hp).astype(mx),
        'w1d':  _pad2(params['w1d'], Fp, Hp).astype(mx),
        'b1':   _pad2(params['b1'], 1, Hp).astype(f32),
        'w2':   _pad2(params['w2'], Hp, Hp).astype(mx),
        'b2':   _pad2(params['b2'], 1, Hp).astype(f32),
        'wc1':  _pad2(params['wc1'], Hp, Hp).astype(mx),
        'bc1':  _pad2(params['bc1'], 1, Hp).astype(f32),
        'wc2':  _pad2(params['wc2'].T, 1, Hp).astype(f32),
        'wn1h': _pad2(params['wn1h'], Fp, Hp).astype(mx),
        'wn1e': _pad2(params['wn1e'], Hp, Hp).astype(mx),
        'bn1':  _pad2(params['bn1'], 1, Hp).astype(f32),
        'wn2':  _pad2(params['wn2'], Hp, Op).astype(mx),
        'bn2':  _pad2(params['bn2'], 1, Op).astype(f32),
    }
    param_order = ['w1r', 'w1s', 'w1d', 'b1', 'w2', 'b2', 'wc1', 'bc1', 'wc2',
                   'wn1h', 'wn1e', 'bn1', 'wn2', 'bn2']
    param_vals = [p[name] for name in param_order]

    grid = (N // tile_n, N // tile_s)

    def dst_spec(c):
        return pl.BlockSpec((tile_n, c), lambda j, k: (j, 0))

    def src_spec(c):
        return pl.BlockSpec((tile_s, c), lambda j, k: (k, 0))

    def full_spec(a):
        return pl.BlockSpec(a.shape, lambda j, k: (0, 0))

    in_specs = ([dst_spec(CP), src_spec(CP), dst_spec(Fp), src_spec(Fp)]
                + [full_spec(v) for v in param_vals])
    out_specs = [pl.BlockSpec((tile_n, CP), lambda j, k: (j, 0)),
                 pl.BlockSpec((tile_n, Op), lambda j, k: (j, 0))]
    out_shape = (jax.ShapeDtypeStruct((N, CP), f32),
                 jax.ShapeDtypeStruct((N, Op), f32))

    kern = functools.partial(_egcl_kernel, n_nodes=N, residual=residual,
                             normalize=normalize, tanh=tanh, mxu_dtype=mxu_dtype)

    coord_pad, h_pad = pl.pallas_call(
        kern,
        out_shape=out_shape,
        grid_spec=pltpu.PrefetchScalarGridSpec(
            num_scalar_prefetch=0, grid=grid,
            in_specs=in_specs, out_specs=out_specs,
            scratch_shapes=[pltpu.VMEM((tile_n, Hp), jnp.float32),   # edge feature sum
                            pltpu.VMEM((tile_n, CP), jnp.float32),   # trans sum
                            pltpu.VMEM((tile_n, Hp), jnp.float32)]), # cached dst proj
        compiler_params=pltpu.CompilerParams(
            dimension_semantics=("parallel", "arbitrary"),
            vmem_limit_bytes=_vmem_limit_bytes()),
    )(x_p, x_p, hh_p, hh_p, *param_vals)

    return coord_pad[:, :3], h_pad[:, :O]


def init_params(key, input_nf, hidden_nf, output_nf):
    """Deterministic torch-Linear-style init.  Weights stored transposed: [in, out]."""
    F, H, O = input_nf, hidden_nf, output_nf
    ks = jax.random.split(key, 12)

    def lin(kw, kb, fan_in, fan_out, bias=True, scale=None):
        a = (1.0 / np.sqrt(fan_in)) if scale is None else scale
        w = jax.random.uniform(kw, (fan_in, fan_out), jnp.float32, -a, a)
        b = (jax.random.uniform(kb, (1, fan_out), jnp.float32, -a, a)
             if bias else None)
        return w, b

    W1, b1 = lin(ks[0], ks[1], 2 * F + 1, H)
    W2, b2 = lin(ks[2], ks[3], H, H)
    Wc1, bc1 = lin(ks[4], ks[5], H, H)
    # xavier_uniform with gain=0.001 for the final coord layer (no bias)
    xav = 0.001 * np.sqrt(6.0 / (H + 1))
    Wc2, _ = lin(ks[6], ks[7], H, 1, bias=False, scale=xav)
    Wn1, bn1 = lin(ks[8], ks[9], H + F, H)
    Wn2, bn2 = lin(ks[10], ks[11], H, O)

    return {
        # edge_mlp layer1 split: rows [radial | hh_src | hh_dst]
        'w1r': W1[0:1, :], 'w1s': W1[1:1 + F, :], 'w1d': W1[1 + F:, :], 'b1': b1,
        'w2': W2, 'b2': b2,
        'wc1': Wc1, 'bc1': bc1, 'wc2': Wc2,
        # node_mlp layer1 split: rows [hh | edge_sum]  (cat order is (hh, edge_sum))
        'wn1h': Wn1[:F, :], 'wn1e': Wn1[F:, :], 'bn1': bn1,
        'wn2': Wn2, 'bn2': bn2,
    }


def reference_forward(x, hh, params, *, residual=True, normalize=False, tanh=False,
                      eps=1e-8, matmul_dtype=jnp.float32):
    """Pure-JAX translation of the PyTorch/DGL forward on a complete graph (no self loops).

    matmul_dtype=jnp.float32 is the faithful full-precision reference;
    matmul_dtype=jnp.bfloat16 emulates the kernel's MXU precision (bf16 operands,
    f32 accumulation) so the kernel can be checked at matched precision.
    """
    N = x.shape[0]

    def mm(a, b):
        return jnp.dot(a.astype(matmul_dtype), b.astype(matmul_dtype),
                       preferred_element_type=jnp.float32)

    src = jnp.array([i for i in range(N) for t in range(N) if i != t], dtype=jnp.int32)
    dst = jnp.array([t for i in range(N) for t in range(N) if i != t], dtype=jnp.int32)

    diff = x[src] - x[dst]
    radial = jnp.sum(diff ** 2, axis=1, keepdims=True)
    # edge_mlp (concat decomposed identically to the kernel; radial term kept in f32)
    e = (radial * params['w1r'] + mm(hh[src], params['w1s'])
         + mm(hh[dst], params['w1d']) + params['b1'])
    e = _silu(e)
    e = _silu(mm(e, params['w2']) + params['b2'])
    c = _silu(mm(e, params['wc1']) + params['bc1'])
    s = c @ params['wc2']
    if tanh:
        s = jnp.tanh(s)
    if normalize:
        diff = diff / (jnp.sqrt(radial) + eps)
    trans = diff * s

    trans_mean = jax.ops.segment_sum(trans, dst, N) / (N - 1)
    edge_sum = jax.ops.segment_sum(e, dst, N)
    coord = x + trans_mean
    n1 = _silu(mm(hh, params['wn1h']) + mm(edge_sum, params['wn1e']) + params['bn1'])
    h = mm(n1, params['wn2']) + params['bn2']
    if residual:
        h = hh + h
    return coord, h


def _run_case(N, input_nf, hidden_nf, output_nf, key, *, tile_n=None, tile_s=None,
              normalize=False, tanh=False):
    kx, kh, kp = jax.random.split(key, 3)
    x = jax.random.normal(kx, (N, 3), dtype=jnp.float32)
    hh = jax.random.normal(kh, (N, input_nf), dtype=jnp.float32)
    params = init_params(kp, input_nf, hidden_nf, output_nf)

    coord, h = e_gcl_h_forward(x, hh, params, tile_n=tile_n, tile_s=tile_s,
                               residual=True, normalize=normalize, tanh=tanh)
    jax.block_until_ready((coord, h))

    # Matched-precision (bf16-MXU) pure-JAX reference.
    coord_ref, h_ref = reference_forward(x, hh, params, residual=True,
                                         normalize=normalize, tanh=tanh,
                                         matmul_dtype=jnp.bfloat16)
    np.testing.assert_allclose(np.asarray(coord), np.asarray(coord_ref),
                               rtol=1e-2, atol=1e-2)
    np.testing.assert_allclose(np.asarray(h), np.asarray(h_ref),
                               rtol=1e-2, atol=1e-2)


if __name__ == "__main__":
    key = jax.random.PRNGKey(0)
    k1, k2, k3 = jax.random.split(key, 3)

    # Small case: N=8 nodes, input_nf=hidden_nf=output_nf=32 (single-tile grid).
    _run_case(8, 32, 32, 32, k1)

    # Larger case exercising the 2-D tiled grid (2 dst tiles x 2 src tiles),
    # i.e. the pl.when init / accumulate / finalize reduction path + dst-proj cache.
    _run_case(64, 32, 32, 32, k2, tile_n=32, tile_s=32)

    # Exercise the normalize + tanh branches.
    _run_case(16, 32, 32, 32, k3, normalize=True, tanh=True)

    print("KERNEL_OK")
</pallas_src>

<mosaic_0001>
module attributes {stable_mosaic.version = 11 : i64} {
  func.func @_egcl_kernel(%arg0: i32, %arg1: i32, %arg2: memref<8x128xf32, #tpu.memory_space<vmem>>, %arg3: memref<8x128xf32, #tpu.memory_space<vmem>>, %arg4: memref<8x128xf32, #tpu.memory_space<vmem>>, %arg5: memref<8x128xf32, #tpu.memory_space<vmem>>, %arg6: memref<1x128xf32, #tpu.memory_space<vmem>>, %arg7: memref<128x128xbf16, #tpu.memory_space<vmem>>, %arg8: memref<128x128xbf16, #tpu.memory_space<vmem>>, %arg9: memref<1x128xf32, #tpu.memory_space<vmem>>, %arg10: memref<128x128xbf16, #tpu.memory_space<vmem>>, %arg11: memref<1x128xf32, #tpu.memory_space<vmem>>, %arg12: memref<128x128xbf16, #tpu.memory_space<vmem>>, %arg13: memref<1x128xf32, #tpu.memory_space<vmem>>, %arg14: memref<1x128xf32, #tpu.memory_space<vmem>>, %arg15: memref<128x128xbf16, #tpu.memory_space<vmem>>, %arg16: memref<128x128xbf16, #tpu.memory_space<vmem>>, %arg17: memref<1x128xf32, #tpu.memory_space<vmem>>, %arg18: memref<128x128xbf16, #tpu.memory_space<vmem>>, %arg19: memref<1x128xf32, #tpu.memory_space<vmem>>, %arg20: memref<8x128xf32, #tpu.memory_space<vmem>>, %arg21: memref<8x128xf32, #tpu.memory_space<vmem>>, %arg22: memref<8x128xf32, #tpu.memory_space<vmem>>, %arg23: memref<8x128xf32, #tpu.memory_space<vmem>>, %arg24: memref<8x128xf32, #tpu.memory_space<vmem>>) attributes {dimension_semantics = [#tpu.dimension_semantics<parallel>, #tpu.dimension_semantics<arbitrary>], iteration_bounds = array<i64: 1, 1>, scalar_prefetch = 0 : i64, scratch_operands = 3 : i64, tpu.core_type = #tpu.core_type<tc>, window_params = [{transform_indices = @transform_0, window_bounds = array<i64: 8, 128>}, {transform_indices = @transform_1, window_bounds = array<i64: 8, 128>}, {transform_indices = @transform_2, window_bounds = array<i64: 8, 128>}, {transform_indices = @transform_3, window_bounds = array<i64: 8, 128>}, {pipeline_mode = #tpu.pipeline_mode<synchronous>, transform_indices = @transform_4, window_bounds = array<i64: 1, 128>}, {pipeline_mode = #tpu.pipeline_mode<synchronous>, transform_indices = @transform_5, window_bounds = array<i64: 128, 128>}, {pipeline_mode = #tpu.pipeline_mode<synchronous>, transform_indices = @transform_6, window_bounds = array<i64: 128, 128>}, {pipeline_mode = #tpu.pipeline_mode<synchronous>, transform_indices = @transform_7, window_bounds = array<i64: 1, 128>}, {pipeline_mode = #tpu.pipeline_mode<synchronous>, transform_indices = @transform_8, window_bounds = array<i64: 128, 128>}, {pipeline_mode = #tpu.pipeline_mode<synchronous>, transform_indices = @transform_9, window_bounds = array<i64: 1, 128>}, {pipeline_mode = #tpu.pipeline_mode<synchronous>, transform_indices = @transform_10, window_bounds = array<i64: 128, 128>}, {pipeline_mode = #tpu.pipeline_mode<synchronous>, transform_indices = @transform_11, window_bounds = array<i64: 1, 128>}, {pipeline_mode = #tpu.pipeline_mode<synchronous>, transform_indices = @transform_12, window_bounds = array<i64: 1, 128>}, {pipeline_mode = #tpu.pipeline_mode<synchronous>, transform_indices = @transform_13, window_bounds = array<i64: 128, 128>}, {pipeline_mode = #tpu.pipeline_mode<synchronous>, transform_indices = @transform_14, window_bounds = array<i64: 128, 128>}, {pipeline_mode = #tpu.pipeline_mode<synchronous>, transform_indices = @transform_15, window_bounds = array<i64: 1, 128>}, {pipeline_mode = #tpu.pipeline_mode<synchronous>, transform_indices = @transform_16, window_bounds = array<i64: 128, 128>}, {pipeline_mode = #tpu.pipeline_mode<synchronous>, transform_indices = @transform_17, window_bounds = array<i64: 1, 128>}, {transform_indices = @transform_18, window_bounds = array<i64: 8, 128>}, {transform_indices = @transform_19, window_bounds = array<i64: 8, 128>}]} {
    %c0 = arith.constant 0 : index
    %c0_0 = arith.constant 0 : index
    %0 = vector.load %arg4[%c0, %c0_0] : memref<8x128xf32, #tpu.memory_space<vmem>>, vector<8x128xf32>
    %c0_i32 = arith.constant 0 : i32
    %1 = arith.cmpi eq, %arg1, %c0_i32 : i32
    %2 = arith.extui %1 : i1 to i32
    %c0_i32_1 = arith.constant 0 : i32
    %3 = arith.cmpi ne, %2, %c0_i32_1 : i32
    scf.if %3 {
      %cst_44 = arith.constant 0.000000e+00 : f32
      %94 = vector.broadcast %cst_44 : f32 to vector<8x128xf32>
      %c0_45 = arith.constant 0 : index
      %c0_46 = arith.constant 0 : index
      %95 = vector.load %arg22[%c0_45, %c0_46] : memref<8x128xf32, #tpu.memory_space<vmem>>, vector<8x128xf32>
      tpu.vector_store %arg22[%c0_45, %c0_46], %94 {strides = array<i32>} : memref<8x128xf32, #tpu.memory_space<vmem>>, vector<8x128xf32>,
      %cst_47 = arith.constant 0.000000e+00 : f32
      %96 = vector.broadcast %cst_47 : f32 to vector<8x128xf32>
      %c0_48 = arith.constant 0 : index
      %c0_49 = arith.constant 0 : index
      %97 = vector.load %arg23[%c0_48, %c0_49] : memref<8x128xf32, #tpu.memory_space<vmem>>, vector<8x128xf32>
      tpu.vector_store %arg23[%c0_48, %c0_49], %96 {strides = array<i32>} : memref<8x128xf32, #tpu.memory_space<vmem>>, vector<8x128xf32>,
      %98 = arith.truncf %0 : vector<8x128xf32> to vector<8x128xbf16>
      %c0_50 = arith.constant 0 : index
      %c0_51 = arith.constant 0 : index
      %99 = vector.load %arg8[%c0_50, %c0_51] : memref<128x128xbf16, #tpu.memory_space<vmem>>, vector<128x128xbf16>
      %cst_52 = arith.constant dense<0.000000e+00> : vector<8x128xf32>
      %100 = tpu.matmul %98, %99, %cst_52 {dimension_numbers = #tpu.dot_dimension_numbers<[1], [0], [0], [1], [0, 0, 1, 1], [], []>} : vector<8x128xbf16>, vector<128x128xbf16>, vector<8x128xf32> -> vector<8x128xf32>
      %c0_53 = arith.constant 0 : index
      %c0_54 = arith.constant 0 : index
      %101 = vector.load %arg9[%c0_53, %c0_54] : memref<1x128xf32, #tpu.memory_space<vmem>>, vector<1x128xf32>
      %102 = vector.broadcast %101 : vector<1x128xf32> to vector<8x128xf32>
      %103 = arith.addf %100, %102 : vector<8x128xf32>
      %c0_55 = arith.constant 0 : index
      %c0_56 = arith.constant 0 : index
      %104 = vector.load %arg24[%c0_55, %c0_56] : memref<8x128xf32, #tpu.memory_space<vmem>>, vector<8x128xf32>
      tpu.vector_store %arg24[%c0_55, %c0_56], %103 {strides = array<i32>} : memref<8x128xf32, #tpu.memory_space<vmem>>, vector<8x128xf32>,
    } else {
    }
    %c0_2 = arith.constant 0 : index
    %c0_3 = arith.constant 0 : index
    %4 = vector.load %arg2[%c0_2, %c0_3] : memref<8x128xf32, #tpu.memory_space<vmem>>, vector<8x128xf32>
    %c0_4 = arith.constant 0 : index
    %c0_5 = arith.constant 0 : index
    %5 = vector.load %arg3[%c0_4, %c0_5] : memref<8x128xf32, #tpu.memory_space<vmem>>, vector<8x128xf32>
    %c0_6 = arith.constant 0 : index
    %c0_7 = arith.constant 0 : index
    %6 = vector.load %arg5[%c0_6, %c0_7] : memref<8x128xf32, #tpu.memory_space<vmem>>, vector<8x128xf32>
    %7 = vector.shape_cast %5 : vector<8x128xf32> to vector<8x1x128xf32>
    %8 = vector.shape_cast %4 : vector<8x128xf32> to vector<1x8x128xf32>
    %9 = vector.broadcast %7 : vector<8x1x128xf32> to vector<8x8x128xf32>
    %10 = vector.broadcast %8 : vector<1x8x128xf32> to vector<8x8x128xf32>
    %11 = arith.subf %9, %10 : vector<8x8x128xf32>
    %12 = arith.mulf %11, %11 : vector<8x8x128xf32>
    %cst = arith.constant dense<0.000000e+00> : vector<8x8xf32>
    %13 = vector.multi_reduction <add>, %12, %cst [2] : vector<8x8x128xf32> to vector<8x8xf32>
    %14 = vector.shape_cast %13 : vector<8x8xf32> to vector<8x8x1xf32>
    %15 = tpu.iota {dimensions = array<i32: 0>} : vector<8x8x1xi32>
    %c8_i32 = arith.constant 8 : i32
    %16 = arith.muli %arg1, %c8_i32 : i32
    %17 = vector.broadcast %16 : i32 to vector<8x8x1xi32>
    %18 = arith.addi %15, %17 : vector<8x8x1xi32>
    %19 = tpu.iota {dimensions = array<i32: 1>} : vector<8x8x1xi32>
    %c8_i32_8 = arith.constant 8 : i32
    %20 = arith.muli %arg0, %c8_i32_8 : i32
    %21 = vector.broadcast %20 : i32 to vector<8x8x1xi32>
    %22 = arith.addi %19, %21 : vector<8x8x1xi32>
    %23 = arith.cmpi ne, %18, %22 : vector<8x8x1xi32>
    %24 = arith.extui %23 : vector<8x8x1xi1> to vector<8x8x1xi32>
    %25 = arith.sitofp %24 : vector<8x8x1xi32> to vector<8x8x1xf32>
    %26 = arith.truncf %6 : vector<8x128xf32> to vector<8x128xbf16>
    %c0_9 = arith.constant 0 : index
    %c0_10 = arith.constant 0 : index
    %27 = vector.load %arg7[%c0_9, %c0_10] : memref<128x128xbf16, #tpu.memory_space<vmem>>, vector<128x128xbf16>
    %cst_11 = arith.constant dense<0.000000e+00> : vector<8x128xf32>
    %28 = tpu.matmul %26, %27, %cst_11 {dimension_numbers = #tpu.dot_dimension_numbers<[1], [0], [0], [1], [0, 0, 1, 1], [], []>} : vector<8x128xbf16>, vector<128x128xbf16>, vector<8x128xf32> -> vector<8x128xf32>
    %c0_12 = arith.constant 0 : index
    %c0_13 = arith.constant 0 : index
    %29 = vector.load %arg6[%c0_12, %c0_13] : memref<1x128xf32, #tpu.memory_space<vmem>>, vector<1x128xf32>
    %30 = vector.shape_cast %29 : vector<1x128xf32> to vector<1x1x128xf32>
    %31 = vector.broadcast %14 : vector<8x8x1xf32> to vector<8x8x128xf32>
    %32 = vector.broadcast %30 : vector<1x1x128xf32> to vector<8x8x128xf32>
    %33 = arith.mulf %31, %32 : vector<8x8x128xf32>
    %34 = vector.shape_cast %28 : vector<8x128xf32> to vector<8x1x128xf32>
    %35 = vector.broadcast %34 : vector<8x1x128xf32> to vector<8x8x128xf32>
    %36 = arith.addf %33, %35 : vector<8x8x128xf32>
    %c0_14 = arith.constant 0 : index
    %c0_15 = arith.constant 0 : index
    %37 = vector.load %arg24[%c0_14, %c0_15] : memref<8x128xf32, #tpu.memory_space<vmem>>, vector<8x128xf32>
    %38 = vector.shape_cast %37 : vector<8x128xf32> to vector<1x8x128xf32>
    %39 = vector.broadcast %38 : vector<1x8x128xf32> to vector<8x8x128xf32>
    %40 = arith.addf %36, %39 : vector<8x8x128xf32>
    %41 = arith.negf %40 : vector<8x8x128xf32>
    %42 = math.exp %41 : vector<8x8x128xf32>
    %cst_16 = arith.constant 1.000000e+00 : f32
    %43 = vector.broadcast %cst_16 : f32 to vector<8x8x128xf32>
    %44 = arith.addf %43, %42 : vector<8x8x128xf32>
    %45 = arith.divf %43, %44 : vector<8x8x128xf32>
    %46 = arith.mulf %40, %45 : vector<8x8x128xf32>
    %47 = vector.shape_cast %46 : vector<8x8x128xf32> to vector<64x128xf32>
    %48 = arith.truncf %47 : vector<64x128xf32> to vector<64x128xbf16>
    %c0_17 = arith.constant 0 : index
    %c0_18 = arith.constant 0 : index
    %49 = vector.load %arg10[%c0_17, %c0_18] : memref<128x128xbf16, #tpu.memory_space<vmem>>, vector<128x128xbf16>
    %cst_19 = arith.constant dense<0.000000e+00> : vector<64x128xf32>
    %50 = tpu.matmul %48, %49, %cst_19 {dimension_numbers = #tpu.dot_dimension_numbers<[1], [0], [0], [1], [0, 0, 1, 1], [], []>} : vector<64x128xbf16>, vector<128x128xbf16>, vector<64x128xf32> -> vector<64x128xf32>
    %c0_20 = arith.constant 0 : index
    %c0_21 = arith.constant 0 : index
    %51 = vector.load %arg11[%c0_20, %c0_21] : memref<1x128xf32, #tpu.memory_space<vmem>>, vector<1x128xf32>
    %52 = vector.broadcast %51 : vector<1x128xf32> to vector<64x128xf32>
    %53 = arith.addf %50, %52 : vector<64x128xf32>
    %54 = arith.negf %53 : vector<64x128xf32>
    %55 = math.exp %54 : vector<64x128xf32>
    %cst_22 = arith.constant 1.000000e+00 : f32
    %56 = vector.broadcast %cst_22 : f32 to vector<64x128xf32>
    %57 = arith.addf %56, %55 : vector<64x128xf32>
    %58 = arith.divf %56, %57 : vector<64x128xf32>
    %59 = arith.mulf %53, %58 : vector<64x128xf32>
    %60 = arith.truncf %59 : vector<64x128xf32> to vector<64x128xbf16>
    %c0_23 = arith.constant 0 : index
    %c0_24 = arith.constant 0 : index
    %61 = vector.load %arg12[%c0_23, %c0_24] : memref<128x128xbf16, #tpu.memory_space<vmem>>, vector<128x128xbf16>
    %cst_25 = arith.constant dense<0.000000e+00> : vector<64x128xf32>
    %62 = tpu.matmul %60, %61, %cst_25 {dimension_numbers = #tpu.dot_dimension_numbers<[1], [0], [0], [1], [0, 0, 1, 1], [], []>} : vector<64x128xbf16>, vector<128x128xbf16>, vector<64x128xf32> -> vector<64x128xf32>
    %c0_26 = arith.constant 0 : index
    %c0_27 = arith.constant 0 : index
    %63 = vector.load %arg13[%c0_26, %c0_27] : memref<1x128xf32, #tpu.memory_space<vmem>>, vector<1x128xf32>
    %64 = vector.broadcast %63 : vector<1x128xf32> to vector<64x128xf32>
    %65 = arith.addf %62, %64 : vector<64x128xf32>
    %66 = arith.negf %65 : vector<64x128xf32>
    %67 = math.exp %66 : vector<64x128xf32>
    %cst_28 = arith.constant 1.000000e+00 : f32
    %68 = vector.broadcast %cst_28 : f32 to vector<64x128xf32>
    %69 = arith.addf %68, %67 : vector<64x128xf32>
    %70 = arith.divf %68, %69 : vector<64x128xf32>
    %71 = arith.mulf %65, %70 : vector<64x128xf32>
    %c0_29 = arith.constant 0 : index
    %c0_30 = arith.constant 0 : index
    %72 = vector.load %arg14[%c0_29, %c0_30] : memref<1x128xf32, #tpu.memory_space<vmem>>, vector<1x128xf32>
    %73 = vector.broadcast %72 : vector<1x128xf32> to vector<64x128xf32>
    %74 = arith.mulf %71, %73 : vector<64x128xf32>
    %cst_31 = arith.constant dense<0.000000e+00> : vector<64xf32>
    %75 = vector.multi_reduction <add>, %74, %cst_31 [1] : vector<64x128xf32> to vector<64xf32>
    %76 = vector.shape_cast %75 : vector<64xf32> to vector<64x1xf32>
    %77 = vector.shape_cast %76 : vector<64x1xf32> to vector<8x8x1xf32>
    %c0_32 = arith.constant 0 : index
    %c0_33 = arith.constant 0 : index
    %78 = vector.load %arg23[%c0_32, %c0_33] : memref<8x128xf32, #tpu.memory_space<vmem>>, vector<8x128xf32>
    %79 = vector.broadcast %77 : vector<8x8x1xf32> to vector<8x8x128xf32>
    %80 = arith.mulf %79, %11 : vector<8x8x128xf32>
    %cst_34 = arith.constant dense<0.000000e+00> : vector<8x128xf32>
    %81 = vector.multi_reduction <add>, %80, %cst_34 [0] : vector<8x8x128xf32> to vector<8x128xf32>
    %82 = arith.addf %78, %81 : vector<8x128xf32>
    %c0_35 = arith.constant 0 : index
    %c0_36 = arith.constant 0 : index
    %83 = vector.load %arg23[%c0_35, %c0_36] : memref<8x128xf32, #tpu.memory_space<vmem>>, vector<8x128xf32>
    tpu.vector_store %arg23[%c0_35, %c0_36], %82 {strides = array<i32>} : memref<8x128xf32, #tpu.memory_space<vmem>>, vector<8x128xf32>,
    %c0_37 = arith.constant 0 : index
    %c0_38 = arith.constant 0 : index
    %84 = vector.load %arg22[%c0_37, %c0_38] : memref<8x128xf32, #tpu.memory_space<vmem>>, vector<8x128xf32>
    %85 = vector.shape_cast %59 : vector<64x128xf32> to vector<8x8x128xf32>
    %86 = vector.broadcast %25 : vector<8x8x1xf32> to vector<8x8x128xf32>
    %87 = arith.mulf %86, %85 : vector<8x8x128xf32>
    %cst_39 = arith.constant dense<0.000000e+00> : vector<8x128xf32>
    %88 = vector.multi_reduction <add>, %87, %cst_39 [0] : vector<8x8x128xf32> to vector<8x128xf32>
    %89 = arith.addf %84, %88 : vector<8x128xf32>
    %c0_40 = arith.constant 0 : index
    %c0_41 = arith.constant 0 : index
    %90 = vector.load %arg22[%c0_40, %c0_41] : memref<8x128xf32, #tpu.memory_space<vmem>>, vector<8x128xf32>
    tpu.vector_store %arg22[%c0_40, %c0_41], %89 {strides = array<i32>} : memref<8x128xf32, #tpu.memory_space<vmem>>, vector<8x128xf32>,
    %c0_i32_42 = arith.constant 0 : i32
    %91 = arith.cmpi eq, %arg1, %c0_i32_42 : i32
    %92 = arith.extui %91 : i1 to i32
    %c0_i32_43 = arith.constant 0 : i32
    %93 = arith.cmpi ne, %92, %c0_i32_43 : i32
    scf.if %93 {
      %c0_44 = arith.constant 0 : index
      %c0_45 = arith.constant 0 : index
      %94 = vector.load %arg23[%c0_44, %c0_45] : memref<8x128xf32, #tpu.memory_space<vmem>>, vector<8x128xf32>
      %cst_46 = arith.constant 0.142857149 : f32
      %95 = vector.broadcast %cst_46 : f32 to vector<8x128xf32>
      %96 = arith.mulf %94, %95 : vector<8x128xf32>
      %97 = arith.addf %4, %96 : vector<8x128xf32>
      %c0_47 = arith.constant 0 : index
      %c0_48 = arith.constant 0 : index
      %98 = vector.load %arg20[%c0_47, %c0_48] : memref<8x128xf32, #tpu.memory_space<vmem>>, vector<8x128xf32>
      tpu.vector_store %arg20[%c0_47, %c0_48], %97 {strides = array<i32>} : memref<8x128xf32, #tpu.memory_space<vmem>>, vector<8x128xf32>,
      %c0_49 = arith.constant 0 : index
      %c0_50 = arith.constant 0 : index
      %99 = vector.load %arg22[%c0_49, %c0_50] : memref<8x128xf32, #tpu.memory_space<vmem>>, vector<8x128xf32>
      %100 = arith.truncf %0 : vector<8x128xf32> to vector<8x128xbf16>
      %c0_51 = arith.constant 0 : index
      %c0_52 = arith.constant 0 : index
      %101 = vector.load %arg15[%c0_51, %c0_52] : memref<128x128xbf16, #tpu.memory_space<vmem>>, vector<128x128xbf16>
      %cst_53 = arith.constant dense<0.000000e+00> : vector<8x128xf32>
      %102 = tpu.matmul %100, %101, %cst_53 {dimension_numbers = #tpu.dot_dimension_numbers<[1], [0], [0], [1], [0, 0, 1, 1], [], []>} : vector<8x128xbf16>, vector<128x128xbf16>, vector<8x128xf32> -> vector<8x128xf32>
      %103 = arith.truncf %99 : vector<8x128xf32> to vector<8x128xbf16>
      %c0_54 = arith.constant 0 : index
      %c0_55 = arith.constant 0 : index
      %104 = vector.load %arg16[%c0_54, %c0_55] : memref<128x128xbf16, #tpu.memory_space<vmem>>, vector<128x128xbf16>
      %cst_56 = arith.constant dense<0.000000e+00> : vector<8x128xf32>
      %105 = tpu.matmul %103, %104, %cst_56 {dimension_numbers = #tpu.dot_dimension_numbers<[1], [0], [0], [1], [0, 0, 1, 1], [], []>} : vector<8x128xbf16>, vector<128x128xbf16>, vector<8x128xf32> -> vector<8x128xf32>
      %106 = arith.addf %102, %105 : vector<8x128xf32>
      %c0_57 = arith.constant 0 : index
      %c0_58 = arith.constant 0 : index
      %107 = vector.load %arg17[%c0_57, %c0_58] : memref<1x128xf32, #tpu.memory_space<vmem>>, vector<1x128xf32>
      %108 = vector.broadcast %107 : vector<1x128xf32> to vector<8x128xf32>
      %109 = arith.addf %106, %108 : vector<8x128xf32>
      %110 = arith.negf %109 : vector<8x128xf32>
      %111 = math.exp %110 : vector<8x128xf32>
      %cst_59 = arith.constant 1.000000e+00 : f32
      %112 = vector.broadcast %cst_59 : f32 to vector<8x128xf32>
      %113 = arith.addf %112, %111 : vector<8x128xf32>
      %114 = arith.divf %112, %113 : vector<8x128xf32>
      %115 = arith.mulf %109, %114 : vector<8x128xf32>
      %116 = arith.truncf %115 : vector<8x128xf32> to vector<8x128xbf16>
      %c0_60 = arith.constant 0 : index
      %c0_61 = arith.constant 0 : index
      %117 = vector.load %arg18[%c0_60, %c0_61] : memref<128x128xbf16, #tpu.memory_space<vmem>>, vector<128x128xbf16>
      %cst_62 = arith.constant dense<0.000000e+00> : vector<8x128xf32>
      %118 = tpu.matmul %116, %117, %cst_62 {dimension_numbers = #tpu.dot_dimension_numbers<[1], [0], [0], [1], [0, 0, 1, 1], [], []>} : vector<8x128xbf16>, vector<128x128xbf16>, vector<8x128xf32> -> vector<8x128xf32>
      %c0_63 = arith.constant 0 : index
      %c0_64 = arith.constant 0 : index
      %119 = vector.load %arg19[%c0_63, %c0_64] : memref<1x128xf32, #tpu.memory_space<vmem>>, vector<1x128xf32>
      %120 = vector.broadcast %119 : vector<1x128xf32> to vector<8x128xf32>
      %121 = arith.addf %118, %120 : vector<8x128xf32>
      %122 = arith.addf %0, %121 : vector<8x128xf32>
      %c0_65 = arith.constant 0 : index
      %c0_66 = arith.constant 0 : index
      %123 = vector.load %arg21[%c0_65, %c0_66] : memref<8x128xf32, #tpu.memory_space<vmem>>, vector<8x128xf32>
      tpu.vector_store %arg21[%c0_65, %c0_66], %122 {strides = array<i32>} : memref<8x128xf32, #tpu.memory_space<vmem>>, vector<8x128xf32>,
    } else {
    }
    return
  }
  func.func @transform_0(%arg0: i32, %arg1: i32) -> (i32, i32) {
    %c0_i32 = arith.constant 0 : i32
    %c0_i32_0 = arith.constant 0 : i32
    return %arg0, %c0_i32 : i32, i32
  }
  func.func @transform_1(%arg0: i32, %arg1: i32) -> (i32, i32) {
    %c0_i32 = arith.constant 0 : i32
    %c0_i32_0 = arith.constant 0 : i32
    return %arg1, %c0_i32 : i32, i32
  }
  func.func @transform_2(%arg0: i32, %arg1: i32) -> (i32, i32) {
    %c0_i32 = arith.constant 0 : i32
    %c0_i32_0 = arith.constant 0 : i32
    return %arg0, %c0_i32 : i32, i32
  }
  func.func @transform_3(%arg0: i32, %arg1: i32) -> (i32, i32) {
    %c0_i32 = arith.constant 0 : i32
    %c0_i32_0 = arith.constant 0 : i32
    return %arg1, %c0_i32 : i32, i32
  }
  func.func @transform_4(%arg0: i32, %arg1: i32) -> (i32, i32) {
    %c0_i32 = arith.constant 0 : i32
    %c0_i32_0 = arith.constant 0 : i32
    %c0_i32_1 = arith.constant 0 : i32
    return %c0_i32, %c0_i32_0 : i32, i32
  }
  func.func @transform_5(%arg0: i32, %arg1: i32) -> (i32, i32) {
    %c0_i32 = arith.constant 0 : i32
    %c0_i32_0 = arith.constant 0 : i32
    %c0_i32_1 = arith.constant 0 : i32
    return %c0_i32, %c0_i32_0 : i32, i32
  }
  func.func @transform_6(%arg0: i32, %arg1: i32) -> (i32, i32) {
    %c0_i32 = arith.constant 0 : i32
    %c0_i32_0 = arith.constant 0 : i32
    %c0_i32_1 = arith.constant 0 : i32
    return %c0_i32, %c0_i32_0 : i32, i32
  }
  func.func @transform_7(%arg0: i32, %arg1: i32) -> (i32, i32) {
    %c0_i32 = arith.constant 0 : i32
    %c0_i32_0 = arith.constant 0 : i32
    %c0_i32_1 = arith.constant 0 : i32
    return %c0_i32, %c0_i32_0 : i32, i32
  }
  func.func @transform_8(%arg0: i32, %arg1: i32) -> (i32, i32) {
    %c0_i32 = arith.constant 0 : i32
    %c0_i32_0 = arith.constant 0 : i32
    %c0_i32_1 = arith.constant 0 : i32
    return %c0_i32, %c0_i32_0 : i32, i32
  }
  func.func @transform_9(%arg0: i32, %arg1: i32) -> (i32, i32) {
    %c0_i32 = arith.constant 0 : i32
    %c0_i32_0 = arith.constant 0 : i32
    %c0_i32_1 = arith.constant 0 : i32
    return %c0_i32, %c0_i32_0 : i32, i32
  }
  func.func @transform_10(%arg0: i32, %arg1: i32) -> (i32, i32) {
    %c0_i32 = arith.constant 0 : i32
    %c0_i32_0 = arith.constant 0 : i32
    %c0_i32_1 = arith.constant 0 : i32
    return %c0_i32, %c0_i32_0 : i32, i32
  }
  func.func @transform_11(%arg0: i32, %arg1: i32) -> (i32, i32) {
    %c0_i32 = arith.constant 0 : i32
    %c0_i32_0 = arith.constant 0 : i32
    %c0_i32_1 = arith.constant 0 : i32
    return %c0_i32, %c0_i32_0 : i32, i32
  }
  func.func @transform_12(%arg0: i32, %arg1: i32) -> (i32, i32) {
    %c0_i32 = arith.constant 0 : i32
    %c0_i32_0 = arith.constant 0 : i32
    %c0_i32_1 = arith.constant 0 : i32
    return %c0_i32, %c0_i32_0 : i32, i32
  }
  func.func @transform_13(%arg0: i32, %arg1: i32) -> (i32, i32) {
    %c0_i32 = arith.constant 0 : i32
    %c0_i32_0 = arith.constant 0 : i32
    %c0_i32_1 = arith.constant 0 : i32
    return %c0_i32, %c0_i32_0 : i32, i32
  }
  func.func @transform_14(%arg0: i32, %arg1: i32) -> (i32, i32) {
    %c0_i32 = arith.constant 0 : i32
    %c0_i32_0 = arith.constant 0 : i32
    %c0_i32_1 = arith.constant 0 : i32
    return %c0_i32, %c0_i32_0 : i32, i32
  }
  func.func @transform_15(%arg0: i32, %arg1: i32) -> (i32, i32) {
    %c0_i32 = arith.constant 0 : i32
    %c0_i32_0 = arith.constant 0 : i32
    %c0_i32_1 = arith.constant 0 : i32
    return %c0_i32, %c0_i32_0 : i32, i32
  }
  func.func @transform_16(%arg0: i32, %arg1: i32) -> (i32, i32) {
    %c0_i32 = arith.constant 0 : i32
    %c0_i32_0 = arith.constant 0 : i32
    %c0_i32_1 = arith.constant 0 : i32
    return %c0_i32, %c0_i32_0 : i32, i32
  }
  func.func @transform_17(%arg0: i32, %arg1: i32) -> (i32, i32) {
    %c0_i32 = arith.constant 0 : i32
    %c0_i32_0 = arith.constant 0 : i32
    %c0_i32_1 = arith.constant 0 : i32
    return %c0_i32, %c0_i32_0 : i32, i32
  }
  func.func @transform_18(%arg0: i32, %arg1: i32) -> (i32, i32) {
    %c0_i32 = arith.constant 0 : i32
    %c0_i32_0 = arith.constant 0 : i32
    return %arg0, %c0_i32 : i32, i32
  }
  func.func @transform_19(%arg0: i32, %arg1: i32) -> (i32, i32) {
    %c0_i32 = arith.constant 0 : i32
    %c0_i32_0 = arith.constant 0 : i32
    return %arg0, %c0_i32 : i32, i32
  }
}

</mosaic_0001>

<llo_original>
// kernel: tpu_custom_call.1
$region0: #{tpu_custom_call.1}
  #allocation0 [shape = 'u32[]', space=smem, size = 0x4, offset = 0x4, fixed_abs, tag = 'smem constant byte address 0x4 - core index']
  #allocation1 [shape = 'u32[144,128]{1,0:T(1,128)}', space=vmem, size = 0x12000, scoped, tag = 'internal scratch']
  #allocation2 [shape = 'f32[8,128]{1,0:T(8,128)}', space=vmem, size = 0x1000, scoped, tag = 'scratch operand']
  #allocation3 [shape = 'f32[8,128]{1,0:T(8,128)}', space=vmem, size = 0x1000, scoped, tag = 'scratch operand']
  #allocation4 [shape = 'f32[8,128]{1,0:T(8,128)}', space=vmem, size = 0x1000, scoped, tag = 'scratch operand']
  %s0 = inlined_call_operand.hbm [shape: f32[8,128], index: 0, kind: input, shape index: {}]
  %s1 = inlined_call_operand.hbm [shape: f32[8,128], index: 1, kind: input, shape index: {}]
  %s2 = inlined_call_operand.hbm [shape: f32[8,128], index: 2, kind: input, shape index: {}]
  %s3 = inlined_call_operand.vmem [shape: f32[8,128], index: 3, kind: input, shape index: {}]
  %s4 = inlined_call_operand.vmem [shape: f32[1,128], index: 4, kind: input, shape index: {}]
  %s5 = inlined_call_operand.hbm [shape: bf16[128,128], index: 5, kind: input, shape index: {}]
  %s6 = inlined_call_operand.hbm [shape: bf16[128,128], index: 6, kind: input, shape index: {}]
  %s7 = inlined_call_operand.vmem [shape: f32[1,128], index: 7, kind: input, shape index: {}]
  %s8 = inlined_call_operand.hbm [shape: bf16[128,128], index: 8, kind: input, shape index: {}]
  %s9 = inlined_call_operand.vmem [shape: f32[1,128], index: 9, kind: input, shape index: {}]
  %s10 = inlined_call_operand.hbm [shape: bf16[128,128], index: 10, kind: input, shape index: {}]
  %s11 = inlined_call_operand.vmem [shape: f32[1,128], index: 11, kind: input, shape index: {}]
  %s12 = inlined_call_operand.vmem [shape: f32[1,128], index: 12, kind: input, shape index: {}]
  %s13 = inlined_call_operand.hbm [shape: bf16[128,128], index: 13, kind: input, shape index: {}]
  %s14 = inlined_call_operand.hbm [shape: bf16[128,128], index: 14, kind: input, shape index: {}]
  %s15 = inlined_call_operand.vmem [shape: f32[1,128], index: 15, kind: input, shape index: {}]
  %s16 = inlined_call_operand.hbm [shape: bf16[128,128], index: 16, kind: input, shape index: {}]
  %s17 = inlined_call_operand.vmem [shape: f32[1,128], index: 17, kind: input, shape index: {}]
  %s18 = inlined_call_operand.hbm [shape: f32[8,128], index: 18, kind: output, shape index: {0}]
  %s19 = inlined_call_operand.hbm [shape: f32[8,128], index: 19, kind: output, shape index: {1}]
  %20 = xla_tuple %s18, %s19
  %s21 = sld [smem:[#allocation0]]
  $region138: #{tpu_custom_call.1} parent=0
    _
  %s23 = ssub.s32 1, %s21
  %s24 = scalar_select 0, %s23, %s21
  $region1: #{tpu_custom_call.1} parent=0
    #allocation5 [shape = 'u8[4096]{0}', space=vmem, size = 0x1000, scoped, tag = 'input window, operand 0, single buffered']
    #allocation6 [shape = 's32[1]{0}', space=sflag, size = 0x4, scoped, tag = 'scoped memory for tpu_custom_call.1']
    #allocation7 [shape = 's32[1]{0}', space=sflag, size = 0x4, scoped, tag = 'scoped memory for tpu_custom_call.1']
    #allocation8 [shape = 'u8[4096]{0}', space=vmem, size = 0x1000, scoped, tag = 'input window, operand 1, single buffered']
    #allocation9 [shape = 's32[1]{0}', space=sflag, size = 0x4, scoped, tag = 'scoped memory for tpu_custom_call.1']
    #allocation10 [shape = 'u8[4096]{0}', space=vmem, size = 0x1000, scoped, tag = 'input window, operand 2, single buffered']
    #allocation11 [shape = 'u8[32768]{0}', space=vmem, size = 0x8000, scoped, tag = 'input window, operand 5, single buffered']
    #allocation12 [shape = 's32[1]{0}', space=sflag, size = 0x4, scoped, tag = 'scoped memory for tpu_custom_call.1']
    #allocation13 [shape = 'u8[32768]{0}', space=vmem, size = 0x8000, scoped, tag = 'input window, operand 6, single buffered']
    #allocation14 [shape = 'u8[32768]{0}', space=vmem, size = 0x8000, scoped, tag = 'input window, operand 8, single buffered']
    #allocation15 [shape = 's32[1]{0}', space=sflag, size = 0x4, scoped, tag = 'scoped memory for tpu_custom_call.1']
    #allocation16 [shape = 'u8[32768]{0}', space=vmem, size = 0x8000, scoped, tag = 'input window, operand 10, single buffered']
    #allocation17 [shape = 'u8[32768]{0}', space=vmem, size = 0x8000, scoped, tag = 'input window, operand 13, single buffered']
    #allocation18 [shape = 's32[1]{0}', space=sflag, size = 0x4, scoped, tag = 'scoped memory for tpu_custom_call.1']
    #allocation19 [shape = 'u8[32768]{0}', space=vmem, size = 0x8000, scoped, tag = 'input window, operand 14, single buffered']
    #allocation20 [shape = 'u8[32768]{0}', space=vmem, size = 0x8000, scoped, tag = 'input window, operand 16, single buffered']
    #allocation21 [shape = 's32[1]{0}', space=sflag, size = 0x4, scoped, tag = 'scoped memory for tpu_custom_call.1']
    #allocation22 [shape = 'u8[4096]{0}', space=vmem, size = 0x1000, scoped, tag = 'output window, operand 0, single buffered']
    #allocation23 [shape = 'u8[4096]{0}', space=vmem, size = 0x1000, scoped, tag = 'output window, operand 1, single buffered']
    #allocation24 [shape = 's32[1]{0}', space=sflag, size = 0x4, scoped, tag = 'scoped memory for tpu_custom_call.1']
    %25 = vsyncpa [#allocation6], 0
    %26 = vsyncpa [#allocation9], 0
    %27 = vsyncpa [#allocation12], 0
    %28 = vsyncpa [#allocation15], 0
    %29 = vsyncpa [#allocation18], 0
    %30 = vsyncpa [#allocation21], 0
    %31 = vsyncpa [#allocation7], 0
    %32 = vsyncpa [#allocation24], 0
    // Predicated region
    $region2: #{tpu_custom_call.1} parent=1 // pred_check
      _
    $region3: #{tpu_custom_call.1} parent=1 // pred_check_branch
      %34 = sbr.rel (0) target = $region5
    $region4: #{tpu_custom_call.1} parent=1 // pred_region
      %s36 = ssub.s32 128, 128
      %37 = vsyncadd [#allocation6], %s36
      %s39 = sshll.u32 [#allocation5], 4
      %s40 = int_to_ptr.vmem [resolvable:$true] %s39
      %42 = dma.hbm_to_vmem [thread:$0]  %s0, 128, %s40, [#allocation6]
    $region5: #{tpu_custom_call.1} parent=1 // pred_fallthru
      _
    // Predicated region
    $region6: #{tpu_custom_call.1} parent=1 // pred_check
      _
    $region7: #{tpu_custom_call.1} parent=1 // pred_check_branch
      %44 = sbr.rel (0) target = $region9
    $region8: #{tpu_custom_call.1} parent=1 // pred_region
      %s46 = ssub.s32 128, 128
      %47 = vsyncadd [#allocation9], %s46
      %s49 = sshll.u32 [#allocation8], 4
      %s50 = int_to_ptr.vmem [resolvable:$true] %s49
      %52 = dma.hbm_to_vmem [thread:$0]  %s1, 128, %s50, [#allocation9]
    $region9: #{tpu_custom_call.1} parent=1 // pred_fallthru
      _
    // Predicated region
    $region10: #{tpu_custom_call.1} parent=1 // pred_check
      _
    $region11: #{tpu_custom_call.1} parent=1 // pred_check_branch
      %54 = sbr.rel (0) target = $region13
    $region12: #{tpu_custom_call.1} parent=1 // pred_region
      %s56 = ssub.s32 128, 128
      %57 = vsyncadd [#allocation9], %s56
      %s59 = sshll.u32 [#allocation10], 4
      %s60 = int_to_ptr.vmem [resolvable:$true] %s59
      %62 = dma.hbm_to_vmem [thread:$0]  %s2, 128, %s60, [#allocation9]
    $region13: #{tpu_custom_call.1} parent=1 // pred_fallthru
      _
    // Predicated region
    $region14: #{tpu_custom_call.1} parent=1 // pred_check
      _
    $region15: #{tpu_custom_call.1} parent=1 // pred_check_branch
      %64 = sbr.rel (0) target = $region17
    $region16: #{tpu_custom_call.1} parent=1 // pred_region
      _
    $region17: #{tpu_custom_call.1} parent=1 // pred_fallthru
      _
    // Predicated region
    $region18: #{tpu_custom_call.1} parent=1 // pred_check
      _
    $region19: #{tpu_custom_call.1} parent=1 // pred_check_branch
      %66 = sbr.rel (0) target = $region21
    $region20: #{tpu_custom_call.1} parent=1 // pred_region
      _
    $region21: #{tpu_custom_call.1} parent=1 // pred_fallthru
      _
    // Predicated region
    $region22: #{tpu_custom_call.1} parent=1 // pred_check
      _
    $region23: #{tpu_custom_call.1} parent=1 // pred_check_branch
      %68 = sbr.rel (0) target = $region25
    $region24: #{tpu_custom_call.1} parent=1 // pred_region
      %s70 = ssub.s32 1024, 1024
      %71 = vsyncadd [#allocation12], %s70
      %s72 = sshll.u32 [#allocation11], 4
      %s73 = int_to_ptr.vmem [resolvable:$true] %s72
      %78 = dma.hbm_to_vmem [thread:$0]  %s5, 1024, %s73, [#allocation12], 64, 64, 4
    $region25: #{tpu_custom_call.1} parent=1 // pred_fallthru
      _
    // Predicated region
    $region26: #{tpu_custom_call.1} parent=1 // pred_check
      _
    $region27: #{tpu_custom_call.1} parent=1 // pred_check_branch
      %80 = sbr.rel (0) target = $region29
    $region28: #{tpu_custom_call.1} parent=1 // pred_region
      %s82 = ssub.s32 1024, 1024
      %83 = vsyncadd [#allocation12], %s82
      %s84 = sshll.u32 [#allocation13], 4
      %s85 = int_to_ptr.vmem [resolvable:$true] %s84
      %90 = dma.hbm_to_vmem [thread:$0]  %s6, 1024, %s85, [#allocation12], 64, 64, 4
    $region29: #{tpu_custom_call.1} parent=1 // pred_fallthru
      _
    // Predicated region
    $region30: #{tpu_custom_call.1} parent=1 // pred_check
      _
    $region31: #{tpu_custom_call.1} parent=1 // pred_check_branch
      %92 = sbr.rel (0) target = $region33
    $region32: #{tpu_custom_call.1} parent=1 // pred_region
      _
    $region33: #{tpu_custom_call.1} parent=1 // pred_fallthru
      _
    // Predicated region
    $region34: #{tpu_custom_call.1} parent=1 // pred_check
      _
    $region35: #{tpu_custom_call.1} parent=1 // pred_check_branch
      %94 = sbr.rel (0) target = $region37
    $region36: #{tpu_custom_call.1} parent=1 // pred_region
      %s96 = ssub.s32 1024, 1024
      %97 = vsyncadd [#allocation15], %s96
      %s98 = sshll.u32 [#allocation14], 4
      %s99 = int_to_ptr.vmem [resolvable:$true] %s98
      %104 = dma.hbm_to_vmem [thread:$0]  %s8, 1024, %s99, [#allocation15], 64, 64, 4
    $region37: #{tpu_custom_call.1} parent=1 // pred_fallthru
      _
    // Predicated region
    $region38: #{tpu_custom_call.1} parent=1 // pred_check
      _
    $region39: #{tpu_custom_call.1} parent=1 // pred_check_branch
      %106 = sbr.rel (0) target = $region41
    $region40: #{tpu_custom_call.1} parent=1 // pred_region
      _
    $region41: #{tpu_custom_call.1} parent=1 // pred_fallthru
      _
    // Predicated region
    $region42: #{tpu_custom_call.1} parent=1 // pred_check
      _
    $region43: #{tpu_custom_call.1} parent=1 // pred_check_branch
      %108 = sbr.rel (0) target = $region45
    $region44: #{tpu_custom_call.1} parent=1 // pred_region
      %s110 = ssub.s32 1024, 1024
      %111 = vsyncadd [#allocation15], %s110
      %s112 = sshll.u32 [#allocation16], 4
      %s113 = int_to_ptr.vmem [resolvable:$true] %s112
      %118 = dma.hbm_to_vmem [thread:$0]  %s10, 1024, %s113, [#allocation15], 64, 64, 4
    $region45: #{tpu_custom_call.1} parent=1 // pred_fallthru
      _
    // Predicated region
    $region46: #{tpu_custom_call.1} parent=1 // pred_check
      _
    $region47: #{tpu_custom_call.1} parent=1 // pred_check_branch
      %120 = sbr.rel (0) target = $region49
    $region48: #{tpu_custom_call.1} parent=1 // pred_region
      _
    $region49: #{tpu_custom_call.1} parent=1 // pred_fallthru
      _
    // Predicated region
    $region50: #{tpu_custom_call.1} parent=1 // pred_check
      _
    $region51: #{tpu_custom_call.1} parent=1 // pred_check_branch
      %122 = sbr.rel (0) target = $region53
    $region52: #{tpu_custom_call.1} parent=1 // pred_region
      _
    $region53: #{tpu_custom_call.1} parent=1 // pred_fallthru
      _
    // Predicated region
    $region54: #{tpu_custom_call.1} parent=1 // pred_check
      _
    $region55: #{tpu_custom_call.1} parent=1 // pred_check_branch
      %124 = sbr.rel (0) target = $region57
    $region56: #{tpu_custom_call.1} parent=1 // pred_region
      %s126 = ssub.s32 1024, 1024
      %127 = vsyncadd [#allocation18], %s126
      %s128 = sshll.u32 [#allocation17], 4
      %s129 = int_to_ptr.vmem [resolvable:$true] %s128
      %134 = dma.hbm_to_vmem [thread:$0]  %s13, 1024, %s129, [#allocation18], 64, 64, 4
    $region57: #{tpu_custom_call.1} parent=1 // pred_fallthru
      _
    // Predicated region
    $region58: #{tpu_custom_call.1} parent=1 // pred_check
      _
    $region59: #{tpu_custom_call.1} parent=1 // pred_check_branch
      %136 = sbr.rel (0) target = $region61
    $region60: #{tpu_custom_call.1} parent=1 // pred_region
      %s138 = ssub.s32 1024, 1024
      %139 = vsyncadd [#allocation18], %s138
      %s140 = sshll.u32 [#allocation19], 4
      %s141 = int_to_ptr.vmem [resolvable:$true] %s140
      %146 = dma.hbm_to_vmem [thread:$0]  %s14, 1024, %s141, [#allocation18], 64, 64, 4
    $region61: #{tpu_custom_call.1} parent=1 // pred_fallthru
      _
    // Predicated region
    $region62: #{tpu_custom_call.1} parent=1 // pred_check
      _
    $region63: #{tpu_custom_call.1} parent=1 // pred_check_branch
      %148 = sbr.rel (0) target = $region65
    $region64: #{tpu_custom_call.1} parent=1 // pred_region
      _
    $region65: #{tpu_custom_call.1} parent=1 // pred_fallthru
      _
    // Predicated region
    $region66: #{tpu_custom_call.1} parent=1 // pred_check
      _
    $region67: #{tpu_custom_call.1} parent=1 // pred_check_branch
      %150 = sbr.rel (0) target = $region69
    $region68: #{tpu_custom_call.1} parent=1 // pred_region
      %s152 = ssub.s32 1024, 1024
      %153 = vsyncadd [#allocation21], %s152
      %s154 = sshll.u32 [#allocation20], 4
      %s155 = int_to_ptr.vmem [resolvable:$true] %s154
      %160 = dma.hbm_to_vmem [thread:$0]  %s16, 1024, %s155, [#allocation21], 64, 64, 4
    $region69: #{tpu_custom_call.1} parent=1 // pred_fallthru
      _
    // Predicated region
    $region70: #{tpu_custom_call.1} parent=1 // pred_check
      _
    $region71: #{tpu_custom_call.1} parent=1 // pred_check_branch
      %162 = sbr.rel (0) target = $region73
    $region72: #{tpu_custom_call.1} parent=1 // pred_region
      _
    $region73: #{tpu_custom_call.1} parent=1 // pred_fallthru
      _
    // Predicated region
    $region74: #{tpu_custom_call.1} parent=1 // pred_check
      _
    $region75: #{tpu_custom_call.1} parent=1 // pred_check_branch
      %164 = sbr.rel (0) target = $region77
    $region76: #{tpu_custom_call.1} parent=1 // pred_region
      %165 = dma.done [#allocation6], 128
    $region77: #{tpu_custom_call.1} parent=1 // pred_fallthru
      _
    // Predicated region
    $region78: #{tpu_custom_call.1} parent=1 // pred_check
      _
    $region79: #{tpu_custom_call.1} parent=1 // pred_check_branch
      %167 = sbr.rel (0) target = $region81
    $region80: #{tpu_custom_call.1} parent=1 // pred_region
      %168 = dma.done [#allocation9], 128
    $region81: #{tpu_custom_call.1} parent=1 // pred_fallthru
      _
    // Predicated region
    $region82: #{tpu_custom_call.1} parent=1 // pred_check
      _
    $region83: #{tpu_custom_call.1} parent=1 // pred_check_branch
      %170 = sbr.rel (0) target = $region85
    $region84: #{tpu_custom_call.1} parent=1 // pred_region
      %171 = dma.done [#allocation9], 128
    $region85: #{tpu_custom_call.1} parent=1 // pred_fallthru
      _
    // Predicated region
    $region86: #{tpu_custom_call.1} parent=1 // pred_check
      _
    $region87: #{tpu_custom_call.1} parent=1 // pred_check_branch
      %173 = sbr.rel (0) target = $region89
    $region88: #{tpu_custom_call.1} parent=1 // pred_region
      %174 = dma.done [#allocation12], 1024
    $region89: #{tpu_custom_call.1} parent=1 // pred_fallthru
      _
    // Predicated region
    $region90: #{tpu_custom_call.1} parent=1 // pred_check
      _
    $region91: #{tpu_custom_call.1} parent=1 // pred_check_branch
      %176 = sbr.rel (0) target = $region93
    $region92: #{tpu_custom_call.1} parent=1 // pred_region
      %177 = dma.done [#allocation12], 1024
    $region93: #{tpu_custom_call.1} parent=1 // pred_fallthru
      _
    // Predicated region
    $region94: #{tpu_custom_call.1} parent=1 // pred_check
      _
    $region95: #{tpu_custom_call.1} parent=1 // pred_check_branch
      %179 = sbr.rel (0) target = $region97
    $region96: #{tpu_custom_call.1} parent=1 // pred_region
      %180 = dma.done [#allocation15], 1024
    $region97: #{tpu_custom_call.1} parent=1 // pred_fallthru
      _
    // Predicated region
    $region98: #{tpu_custom_call.1} parent=1 // pred_check
      _
    $region99: #{tpu_custom_call.1} parent=1 // pred_check_branch
      %182 = sbr.rel (0) target = $region101
    $region100: #{tpu_custom_call.1} parent=1 // pred_region
      %183 = dma.done [#allocation15], 1024
    $region101: #{tpu_custom_call.1} parent=1 // pred_fallthru
      _
    // Predicated region
    $region102: #{tpu_custom_call.1} parent=1 // pred_check
      _
    $region103: #{tpu_custom_call.1} parent=1 // pred_check_branch
      %185 = sbr.rel (0) target = $region105
    $region104: #{tpu_custom_call.1} parent=1 // pred_region
      %186 = dma.done [#allocation18], 1024
    $region105: #{tpu_custom_call.1} parent=1 // pred_fallthru
      _
    // Predicated region
    $region106: #{tpu_custom_call.1} parent=1 // pred_check
      _
    $region107: #{tpu_custom_call.1} parent=1 // pred_check_branch
      %188 = sbr.rel (0) target = $region109
    $region108: #{tpu_custom_call.1} parent=1 // pred_region
      %189 = dma.done [#allocation18], 1024
    $region109: #{tpu_custom_call.1} parent=1 // pred_fallthru
      _
    // Predicated region
    $region110: #{tpu_custom_call.1} parent=1 // pred_check
      _
    $region111: #{tpu_custom_call.1} parent=1 // pred_check_branch
      %191 = sbr.rel (0) target = $region113
    $region112: #{tpu_custom_call.1} parent=1 // pred_region
      %192 = dma.done [#allocation21], 1024
    $region113: #{tpu_custom_call.1} parent=1 // pred_fallthru
      _
    %v194 = vld [vmem:[#allocation10] sm:$0xff]
    %p195 = scmp.eq.s32.totalorder 0, 0
    // Predicated region
    $region114: #{tpu_custom_call.1} parent=1 // pred_check
      %p196 = pneg %p195
    $region115: #{tpu_custom_call.1} parent=1 // pred_check_branch
      %198 = sbr.rel (%p196) target = $region117
    $region116: #{tpu_custom_call.1} parent=1 // pred_region
      %199 = vst [vmem:[#allocation2] sm:$0xff] 0.0
      %200 = vst [vmem:[#allocation3] sm:$0xff] 0.0
      %v201 = vpack.c.bf16 %v194, %v194
      %v202 = vld [vmem:[#allocation13] sm:$0xf]
      %v203 = vld [vmem:[#allocation13 + $0x4] sm:$0xf]
      %v204 = vld [vmem:[#allocation13 + $0x8] sm:$0xf]
      %v205 = vld [vmem:[#allocation13 + $0xc] sm:$0xf]
      %v206 = vld [vmem:[#allocation13 + $0x10] sm:$0xf]
      %v207 = vld [vmem:[#allocation13 + $0x14] sm:$0xf]
      %v208 = vld [vmem:[#allocation13 + $0x18] sm:$0xf]
      %v209 = vld [vmem:[#allocation13 + $0x1c] sm:$0xf]
      %v210 = vld [vmem:[#allocation13 + $0x20] sm:$0xf]
      %v211 = vld [vmem:[#allocation13 + $0x24] sm:$0xf]
      %v212 = vld [vmem:[#allocation13 + $0x28] sm:$0xf]
      %v213 = vld [vmem:[#allocation13 + $0x2c] sm:$0xf]
      %v214 = vld [vmem:[#allocation13 + $0x30] sm:$0xf]
      %v215 = vld [vmem:[#allocation13 + $0x34] sm:$0xf]
      %v216 = vld [vmem:[#allocation13 + $0x38] sm:$0xf]
      %v217 = vld [vmem:[#allocation13 + $0x3c] sm:$0xf]
      %v218 = vld [vmem:[%s7] sm:$0x1]
      %v220 = vlaneseq
      %v221 = vshrl.u32 %v220, 7
      %v222 = vsub.s32 0, %v221
      %v223 = vrot.slane %v218, %v222
      %v241 = vunpack.c.l.b16 %v202
      %v242 = vunpack.c.l.b16 %v203
      %v243 = vunpack.c.l.b16 %v204
      %v244 = vunpack.c.l.b16 %v205
      %v245 = vunpack.c.l.b16 %v206
      %v246 = vunpack.c.l.b16 %v207
      %v247 = vunpack.c.l.b16 %v208
      %v248 = vunpack.c.l.b16 %v209
      %v249 = vunpack.c.l.b16 %v210
      %v250 = vunpack.c.l.b16 %v211
      %v251 = vunpack.c.l.b16 %v212
      %v252 = vunpack.c.l.b16 %v213
      %v253 = vunpack.c.l.b16 %v214
      %v254 = vunpack.c.l.b16 %v215
      %v255 = vunpack.c.l.b16 %v216
      %v256 = vunpack.c.l.b16 %v217
      %v257 = vpack.c.b16 %v242, %v241
      %v258 = vpack.c.b16 %v244, %v243
      %v259 = vpack.c.b16 %v246, %v245
      %v260 = vpack.c.b16 %v248, %v247
      %v261 = vpack.c.b16 %v250, %v249
      %v262 = vpack.c.b16 %v252, %v251
      %v263 = vpack.c.b16 %v254, %v253
      %v264 = vpack.c.b16 %v256, %v255
      %273 = vmatprep.subr.bf16.mxu0 0
      %274 = vmatpush1.bf16.msra.mxu0 %v257
      %275 = vmatprep.subr.bf16.mxu0 0
      %276 = vmatpush1.bf16.msra.mxu0 %v258
      %277 = vmatprep.subr.bf16.mxu0 0
      %278 = vmatpush1.bf16.msra.mxu0 %v259
      %279 = vmatprep.subr.bf16.mxu0 0
      %280 = vmatpush1.bf16.msra.mxu0 %v260
      %281 = vmatprep.subr.bf16.mxu0 0
      %282 = vmatpush1.bf16.msra.mxu0 %v261
      %283 = vmatprep.subr.bf16.mxu0 0
      %284 = vmatpush1.bf16.msra.mxu0 %v262
      %285 = vmatprep.subr.bf16.mxu0 0
      %286 = vmatpush1.bf16.msra.mxu0 %v263
      %287 = vmatprep.subr.bf16.mxu0 0
      %288 = vmatpush1.bf16.msra.mxu0 %v264
      %289 = vmatprep.subr.bf16.mxu0 0
      %290 = vmatpush1.bf16.msra.mxu0 0
      %291 = vmatprep.subr.bf16.mxu0 0
      %292 = vmatpush1.bf16.msra.mxu0 0
      %293 = vmatprep.subr.bf16.mxu0 0
      %294 = vmatpush1.bf16.msra.mxu0 0
      %295 = vmatprep.subr.bf16.mxu0 0
      %296 = vmatpush1.bf16.msra.mxu0 0
      %297 = vmatprep.subr.bf16.mxu0 0
      %298 = vmatpush1.bf16.msra.mxu0 0
      %299 = vmatprep.subr.bf16.mxu0 0
      %300 = vmatpush1.bf16.msra.mxu0 0
      %301 = vmatprep.subr.bf16.mxu0 0
      %302 = vmatpush1.bf16.msra.mxu0 0
      %303 = vmatprep.subr.bf16.mxu0 0
      %304 = vmatpush1.bf16.msra.mxu0 0
      %305 = vmatprep.mubr.bf16.mxu0 0
      %306 = vmatmul.mubr.bf16.gmra.mrb[0].mxu0 %v201
      %v307 = vpop.f32.mrb[0].mxu0
      %v308 = vadd.f32 %v223, %v307
      %v309 = vpop.f32.mrb[0].mxu0
      %v310 = vpop.f32.mrb[0].mxu0
      %v311 = vpop.f32.mrb[0].mxu0
      %312 = vdwg.mxu0
      %313 = vst [vmem:[#allocation4] sm:$0xff] %v308
    $region117: #{tpu_custom_call.1} parent=1 // pred_fallthru
      _
    %v314 = vld [vmem:[#allocation5] sm:$0xff]
    %v315 = vld [vmem:[#allocation8] sm:$0xff]
    %v316 = vld [vmem:[%s3] sm:$0xff]
    %v318 = vcombine.high %v315, %v315
    %v320 = vunpack.c.l.s4 1966171168
    %v321 = vunpack.c.0.s8 %v320
    %v322 = vlaneseq
    %v323 = vshrl.u32 %v322, 7
    %v324 = vsub.s32 %v321, %v323
    %v325 = vrot.slane %v315, %v324
    %v327 = vunpack.c.l.s4 1966171168
    %v328 = vunpack.c.0.s8 %v327
    %v329 = vlaneseq
    %v330 = vshrl.u32 %v329, 7
    %v331 = vsub.s32 %v328, %v330
    %v332 = vrot.slane %v318, %v331
    %v333 = vcombine.high %v325, %v325
    %v334 = vcombine.high %v332, %v332
    %v336 = vunpack.c.l.s4 1966171168
    %v337 = vunpack.c.0.s8 %v336
    %v338 = vlaneseq
    %v339 = vshrl.u32 %v338, 7
    %v340 = vsub.s32 %v337, %v339
    %v341 = vrot.slane %v325, %v340
    %v343 = vunpack.c.l.s4 1966171168
    %v344 = vunpack.c.0.s8 %v343
    %v345 = vlaneseq
    %v346 = vshrl.u32 %v345, 7
    %v347 = vsub.s32 %v344, %v346
    %v348 = vrot.slane %v332, %v347
    %v350 = vunpack.c.l.s4 1966171168
    %v351 = vunpack.c.0.s8 %v350
    %v352 = vlaneseq
    %v353 = vshrl.u32 %v352, 7
    %v354 = vsub.s32 %v351, %v353
    %v355 = vrot.slane %v333, %v354
    %v357 = vunpack.c.l.s4 1966171168
    %v358 = vunpack.c.0.s8 %v357
    %v359 = vlaneseq
    %v360 = vshrl.u32 %v359, 7
    %v361 = vsub.s32 %v358, %v360
    %v362 = vrot.slane %v334, %v361
    %v363 = vcombine.high %v341, %v341
    %v364 = vcombine.high %v348, %v348
    %v365 = vcombine.high %v355, %v355
    %v366 = vcombine.high %v362, %v362
    %v367 = vlaneseq
    %v368 = vshrl.u32 %v367, 7
    %v369 = vsub.s32 0, %v368
    %v370 = vrot.slane %v341, %v369
    %v371 = vlaneseq
    %v372 = vshrl.u32 %v371, 7
    %v373 = vsub.s32 0, %v372
    %v374 = vrot.slane %v355, %v373
    %v375 = vlaneseq
    %v376 = vshrl.u32 %v375, 7
    %v377 = vsub.s32 0, %v376
    %v378 = vrot.slane %v363, %v377
    %v379 = vlaneseq
    %v380 = vshrl.u32 %v379, 7
    %v381 = vsub.s32 0, %v380
    %v382 = vrot.slane %v365, %v381
    %v383 = vlaneseq
    %v384 = vshrl.u32 %v383, 7
    %v385 = vsub.s32 0, %v384
    %v386 = vrot.slane %v348, %v385
    %v387 = vlaneseq
    %v388 = vshrl.u32 %v387, 7
    %v389 = vsub.s32 0, %v388
    %v390 = vrot.slane %v362, %v389
    %v391 = vlaneseq
    %v392 = vshrl.u32 %v391, 7
    %v393 = vsub.s32 0, %v392
    %v394 = vrot.slane %v364, %v393
    %v395 = vlaneseq
    %v396 = vshrl.u32 %v395, 7
    %v397 = vsub.s32 0, %v396
    %v398 = vrot.slane %v366, %v397
    %v407 = vsub.f32 %v370, %v314
    %v408 = vsub.f32 %v374, %v314
    %v409 = vsub.f32 %v378, %v314
    %v410 = vsub.f32 %v382, %v314
    %v411 = vsub.f32 %v386, %v314
    %v412 = vsub.f32 %v390, %v314
    %v413 = vsub.f32 %v394, %v314
    %v414 = vsub.f32 %v398, %v314
    %v415 = vmul.f32 %v407, %v407
    %v416 = vmul.f32 %v408, %v408
    %v417 = vmul.f32 %v409, %v409
    %v418 = vmul.f32 %v410, %v410
    %v419 = vmul.f32 %v411, %v411
    %v420 = vmul.f32 %v412, %v412
    %v421 = vmul.f32 %v413, %v413
    %v422 = vmul.f32 %v414, %v414
    %423 = vadd.xlane.f32.xlu0 %v415
    %v424 = vpop.xlane.xlu0 %423
    %425 = vadd.xlane.f32.xlu0 %v416
    %v426 = vpop.xlane.xlu0 %425
    %427 = vadd.xlane.f32.xlu0 %v417
    %v428 = vpop.xlane.xlu0 %427
    %429 = vadd.xlane.f32.xlu0 %v418
    %v430 = vpop.xlane.xlu0 %429
    %431 = vadd.xlane.f32.xlu0 %v419
    %v432 = vpop.xlane.xlu0 %431
    %433 = vadd.xlane.f32.xlu0 %v420
    %v434 = vpop.xlane.xlu0 %433
    %435 = vadd.xlane.f32.xlu0 %v421
    %v436 = vpop.xlane.xlu0 %435
    %437 = vadd.xlane.f32.xlu0 %v422
    %v438 = vpop.xlane.xlu0 %437
    %s439 = smul.u32 0, 8
    %v440 = vstv %s439
    %v441 = vadd.s32 %v440, 1
    %v442 = vadd.s32 %v440, 2
    %v443 = vadd.s32 %v440, 3
    %v444 = vadd.s32 %v440, 4
    %v445 = vadd.s32 %v440, 5
    %v446 = vadd.s32 %v440, 6
    %v447 = vadd.s32 %v440, 7
    %v448 = vlaneseq
    %v449 = vshrl.u32 %v448, 7
    %s450 = smul.u32 0, 8
    %v451 = vstv %s450
    %v452 = vadd.s32 %v449, %v451
    %vm453 = vcmp.ne.s32.totalorder %v440, %v452
    %vm454 = vcmp.ne.s32.totalorder %v441, %v452
    %vm455 = vcmp.ne.s32.totalorder %v442, %v452
    %vm456 = vcmp.ne.s32.totalorder %v443, %v452
    %vm457 = vcmp.ne.s32.totalorder %v444, %v452
    %vm458 = vcmp.ne.s32.totalorder %v445, %v452
    %vm459 = vcmp.ne.s32.totalorder %v446, %v452
    %vm460 = vcmp.ne.s32.totalorder %v447, %v452
    %v461 = vsel %vm453, 1, 0
    %v462 = vsel %vm454, 1, 0
    %v463 = vsel %vm455, 1, 0
    %v464 = vsel %vm456, 1, 0
    %v465 = vsel %vm457, 1, 0
    %v466 = vsel %vm458, 1, 0
    %v467 = vsel %vm459, 1, 0
    %v468 = vsel %vm460, 1, 0
    %v469 = vcvt.s32.f32 %v461
    %v470 = vcvt.s32.f32 %v462
    %v471 = vcvt.s32.f32 %v463
    %v472 = vcvt.s32.f32 %v464
    %v473 = vcvt.s32.f32 %v465
    %v474 = vcvt.s32.f32 %v466
    %v475 = vcvt.s32.f32 %v467
    %v476 = vcvt.s32.f32 %v468
    %v477 = vpack.c.bf16 %v316, %v316
    %v478 = vld [vmem:[#allocation11] sm:$0xf]
    %v479 = vld [vmem:[#allocation11 + $0x4] sm:$0xf]
    %v480 = vld [vmem:[#allocation11 + $0x8] sm:$0xf]
    %v481 = vld [vmem:[#allocation11 + $0xc] sm:$0xf]
    %v482 = vld [vmem:[#allocation11 + $0x10] sm:$0xf]
    %v483 = vld [vmem:[#allocation11 + $0x14] sm:$0xf]
    %v484 = vld [vmem:[#allocation11 + $0x18] sm:$0xf]
    %v485 = vld [vmem:[#allocation11 + $0x1c] sm:$0xf]
    %v486 = vld [vmem:[#allocation11 + $0x20] sm:$0xf]
    %v487 = vld [vmem:[#allocation11 + $0x24] sm:$0xf]
    %v488 = vld [vmem:[#allocation11 + $0x28] sm:$0xf]
    %v489 = vld [vmem:[#allocation11 + $0x2c] sm:$0xf]
    %v490 = vld [vmem:[#allocation11 + $0x30] sm:$0xf]
    %v491 = vld [vmem:[#allocation11 + $0x34] sm:$0xf]
    %v492 = vld [vmem:[#allocation11 + $0x38] sm:$0xf]
    %v493 = vld [vmem:[#allocation11 + $0x3c] sm:$0xf]
    %v510 = vunpack.c.l.b16 %v478
    %v511 = vunpack.c.l.b16 %v479
    %v512 = vunpack.c.l.b16 %v480
    %v513 = vunpack.c.l.b16 %v481
    %v514 = vunpack.c.l.b16 %v482
    %v515 = vunpack.c.l.b16 %v483
    %v516 = vunpack.c.l.b16 %v484
    %v517 = vunpack.c.l.b16 %v485
    %v518 = vunpack.c.l.b16 %v486
    %v519 = vunpack.c.l.b16 %v487
    %v520 = vunpack.c.l.b16 %v488
    %v521 = vunpack.c.l.b16 %v489
    %v522 = vunpack.c.l.b16 %v490
    %v523 = vunpack.c.l.b16 %v491
    %v524 = vunpack.c.l.b16 %v492
    %v525 = vunpack.c.l.b16 %v493
    %v526 = vpack.c.b16 %v511, %v510
    %v527 = vpack.c.b16 %v513, %v512
    %v528 = vpack.c.b16 %v515, %v514
    %v529 = vpack.c.b16 %v517, %v516
    %v530 = vpack.c.b16 %v519, %v518
    %v531 = vpack.c.b16 %v521, %v520
    %v532 = vpack.c.b16 %v523, %v522
    %v533 = vpack.c.b16 %v525, %v524
    %542 = vmatprep.subr.bf16.mxu0 0
    %543 = vmatpush1.bf16.msra.mxu0 %v526
    %544 = vmatprep.subr.bf16.mxu0 0
    %545 = vmatpush1.bf16.msra.mxu0 %v527
    %546 = vmatprep.subr.bf16.mxu0 0
    %547 = vmatpush1.bf16.msra.mxu0 %v528
    %548 = vmatprep.subr.bf16.mxu0 0
    %549 = vmatpush1.bf16.msra.mxu0 %v529
    %550 = vmatprep.subr.bf16.mxu0 0
    %551 = vmatpush1.bf16.msra.mxu0 %v530
    %552 = vmatprep.subr.bf16.mxu0 0
    %553 = vmatpush1.bf16.msra.mxu0 %v531
    %554 = vmatprep.subr.bf16.mxu0 0
    %555 = vmatpush1.bf16.msra.mxu0 %v532
    %556 = vmatprep.subr.bf16.mxu0 0
    %557 = vmatpush1.bf16.msra.mxu0 %v533
    %558 = vmatprep.subr.bf16.mxu0 0
    %559 = vmatpush1.bf16.msra.mxu0 0
    %560 = vmatprep.subr.bf16.mxu0 0
    %561 = vmatpush1.bf16.msra.mxu0 0
    %562 = vmatprep.subr.bf16.mxu0 0
    %563 = vmatpush1.bf16.msra.mxu0 0
    %564 = vmatprep.subr.bf16.mxu0 0
    %565 = vmatpush1.bf16.msra.mxu0 0
    %566 = vmatprep.subr.bf16.mxu0 0
    %567 = vmatpush1.bf16.msra.mxu0 0
    %568 = vmatprep.subr.bf16.mxu0 0
    %569 = vmatpush1.bf16.msra.mxu0 0
    %570 = vmatprep.subr.bf16.mxu0 0
    %571 = vmatpush1.bf16.msra.mxu0 0
    %572 = vmatprep.subr.bf16.mxu0 0
    %573 = vmatpush1.bf16.msra.mxu0 0
    %574 = vmatprep.mubr.bf16.mxu0 0
    %575 = vmatmul.mubr.bf16.gmra.mrb[0].mxu0 %v477
    %v576 = vpop.f32.mrb[0].mxu0
    %v577 = vadd.f32 0.0, %v576
    %v578 = vpop.f32.mrb[0].mxu0
    %v579 = vpop.f32.mrb[0].mxu0
    %v580 = vpop.f32.mrb[0].mxu0
    %581 = vdwg.mxu0
    %v582 = vld [vmem:[%s4] sm:$0x1]
    %v584 = vlaneseq
    %v585 = vshrl.u32 %v584, 7
    %v586 = vsub.s32 0, %v585
    %v587 = vrot.slane %v582, %v586
    %v589 = vmul.f32 %v424, %v587
    %v590 = vmul.f32 %v426, %v587
    %v591 = vmul.f32 %v428, %v587
    %v592 = vmul.f32 %v430, %v587
    %v593 = vmul.f32 %v432, %v587
    %v594 = vmul.f32 %v434, %v587
    %v595 = vmul.f32 %v436, %v587
    %v596 = vmul.f32 %v438, %v587
    %v598 = vcombine.high %v577, %v577
    %v600 = vunpack.c.l.s4 1966171168
    %v601 = vunpack.c.0.s8 %v600
    %v602 = vlaneseq
    %v603 = vshrl.u32 %v602, 7
    %v604 = vsub.s32 %v601, %v603
    %v605 = vrot.slane %v577, %v604
    %v607 = vunpack.c.l.s4 1966171168
    %v608 = vunpack.c.0.s8 %v607
    %v609 = vlaneseq
    %v610 = vshrl.u32 %v609, 7
    %v611 = vsub.s32 %v608, %v610
    %v612 = vrot.slane %v598, %v611
    %v613 = vcombine.high %v605, %v605
    %v614 = vcombine.high %v612, %v612
    %v616 = vunpack.c.l.s4 1966171168
    %v617 = vunpack.c.0.s8 %v616
    %v618 = vlaneseq
    %v619 = vshrl.u32 %v618, 7
    %v620 = vsub.s32 %v617, %v619
    %v621 = vrot.slane %v605, %v620
    %v623 = vunpack.c.l.s4 1966171168
    %v624 = vunpack.c.0.s8 %v623
    %v625 = vlaneseq
    %v626 = vshrl.u32 %v625, 7
    %v627 = vsub.s32 %v624, %v626
    %v628 = vrot.slane %v612, %v627
    %v630 = vunpack.c.l.s4 1966171168
    %v631 = vunpack.c.0.s8 %v630
    %v632 = vlaneseq
    %v633 = vshrl.u32 %v632, 7
    %v634 = vsub.s32 %v631, %v633
    %v635 = vrot.slane %v613, %v634
    %v637 = vunpack.c.l.s4 1966171168
    %v638 = vunpack.c.0.s8 %v637
    %v639 = vlaneseq
    %v640 = vshrl.u32 %v639, 7
    %v641 = vsub.s32 %v638, %v640
    %v642 = vrot.slane %v614, %v641
    %v643 = vcombine.high %v621, %v621
    %v644 = vcombine.high %v628, %v628
    %v645 = vcombine.high %v635, %v635
    %v646 = vcombine.high %v642, %v642
    %v647 = vlaneseq
    %v648 = vshrl.u32 %v647, 7
    %v649 = vsub.s32 0, %v648
    %v650 = vrot.slane %v621, %v649
    %v651 = vlaneseq
    %v652 = vshrl.u32 %v651, 7
    %v653 = vsub.s32 0, %v652
    %v654 = vrot.slane %v635, %v653
    %v655 = vlaneseq
    %v656 = vshrl.u32 %v655, 7
    %v657 = vsub.s32 0, %v656
    %v658 = vrot.slane %v643, %v657
    %v659 = vlaneseq
    %v660 = vshrl.u32 %v659, 7
    %v661 = vsub.s32 0, %v660
    %v662 = vrot.slane %v645, %v661
    %v663 = vlaneseq
    %v664 = vshrl.u32 %v663, 7
    %v665 = vsub.s32 0, %v664
    %v666 = vrot.slane %v628, %v665
    %v667 = vlaneseq
    %v668 = vshrl.u32 %v667, 7
    %v669 = vsub.s32 0, %v668
    %v670 = vrot.slane %v642, %v669
    %v671 = vlaneseq
    %v672 = vshrl.u32 %v671, 7
    %v673 = vsub.s32 0, %v672
    %v674 = vrot.slane %v644, %v673
    %v675 = vlaneseq
    %v676 = vshrl.u32 %v675, 7
    %v677 = vsub.s32 0, %v676
    %v678 = vrot.slane %v646, %v677
    %v687 = vadd.f32 %v589, %v650
    %v688 = vadd.f32 %v590, %v654
    %v689 = vadd.f32 %v591, %v658
    %v690 = vadd.f32 %v592, %v662
    %v691 = vadd.f32 %v593, %v666
    %v692 = vadd.f32 %v594, %v670
    %v693 = vadd.f32 %v595, %v674
    %v694 = vadd.f32 %v596, %v678
    %v695 = vld [vmem:[#allocation4] sm:$0xff]
    %v696 = vadd.f32 %v687, %v695
    %v697 = vadd.f32 %v688, %v695
    %v698 = vadd.f32 %v689, %v695
    %v699 = vadd.f32 %v690, %v695
    %v700 = vadd.f32 %v691, %v695
    %v701 = vadd.f32 %v692, %v695
    %v702 = vadd.f32 %v693, %v695
    %v703 = vadd.f32 %v694, %v695
    %v704 = vxor.u32 %v696, 2147483648
    %v705 = vxor.u32 %v697, 2147483648
    %v706 = vxor.u32 %v698, 2147483648
    %v707 = vxor.u32 %v699, 2147483648
    %v708 = vxor.u32 %v700, 2147483648
    %v709 = vxor.u32 %v701, 2147483648
    %v710 = vxor.u32 %v702, 2147483648
    %v711 = vxor.u32 %v703, 2147483648
    %v712 = vmul.f32 %v704, 1.442695
    %v713 = vpow.pop %v712
    %v714 = vmul.f32 %v705, 1.442695
    %v715 = vpow.pop %v714
    %v716 = vmul.f32 %v706, 1.442695
    %v717 = vpow.pop %v716
    %v718 = vmul.f32 %v707, 1.442695
    %v719 = vpow.pop %v718
    %v720 = vmul.f32 %v708, 1.442695
    %v721 = vpow.pop %v720
    %v722 = vmul.f32 %v709, 1.442695
    %v723 = vpow.pop %v722
    %v724 = vmul.f32 %v710, 1.442695
    %v725 = vpow.pop %v724
    %v726 = vmul.f32 %v711, 1.442695
    %v727 = vpow.pop %v726
    %v728 = vadd.f32 %v713, 1.0
    %v729 = vadd.f32 %v715, 1.0
    %v730 = vadd.f32 %v717, 1.0
    %v731 = vadd.f32 %v719, 1.0
    %v732 = vadd.f32 %v721, 1.0
    %v733 = vadd.f32 %v723, 1.0
    %v734 = vadd.f32 %v725, 1.0
    %v735 = vadd.f32 %v727, 1.0
    %v736 = vrcp.pop %v728
    %v737 = vmul.f32 1.0, %v736
    %v738 = vrcp.pop %v729
    %v739 = vmul.f32 1.0, %v738
    %v740 = vrcp.pop %v730
    %v741 = vmul.f32 1.0, %v740
    %v742 = vrcp.pop %v731
    %v743 = vmul.f32 1.0, %v742
    %v744 = vrcp.pop %v732
    %v745 = vmul.f32 1.0, %v744
    %v746 = vrcp.pop %v733
    %v747 = vmul.f32 1.0, %v746
    %v748 = vrcp.pop %v734
    %v749 = vmul.f32 1.0, %v748
    %v750 = vrcp.pop %v735
    %v751 = vmul.f32 1.0, %v750
    %v752 = vmul.f32 %v696, %v737
    %v753 = vmul.f32 %v697, %v739
    %v754 = vmul.f32 %v698, %v741
    %v755 = vmul.f32 %v699, %v743
    %v756 = vmul.f32 %v700, %v745
    %v757 = vmul.f32 %v701, %v747
    %v758 = vmul.f32 %v702, %v749
    %v759 = vmul.f32 %v703, %v751
    %v760 = vpack.c.bf16 %v753, %v752
    %v761 = vpack.c.bf16 %v755, %v754
    %v762 = vpack.c.bf16 %v757, %v756
    %v763 = vpack.c.bf16 %v759, %v758
    %v764 = vld [vmem:[#allocation14] sm:$0xf]
    %v765 = vld [vmem:[#allocation14 + $0x4] sm:$0xf]
    %v766 = vld [vmem:[#allocation14 + $0x8] sm:$0xf]
    %v767 = vld [vmem:[#allocation14 + $0xc] sm:$0xf]
    %v768 = vld [vmem:[#allocation14 + $0x10] sm:$0xf]
    %v769 = vld [vmem:[#allocation14 + $0x14] sm:$0xf]
    %v770 = vld [vmem:[#allocation14 + $0x18] sm:$0xf]
    %v771 = vld [vmem:[#allocation14 + $0x1c] sm:$0xf]
    %v772 = vld [vmem:[#allocation14 + $0x20] sm:$0xf]
    %v773 = vld [vmem:[#allocation14 + $0x24] sm:$0xf]
    %v774 = vld [vmem:[#allocation14 + $0x28] sm:$0xf]
    %v775 = vld [vmem:[#allocation14 + $0x2c] sm:$0xf]
    %v776 = vld [vmem:[#allocation14 + $0x30] sm:$0xf]
    %v777 = vld [vmem:[#allocation14 + $0x34] sm:$0xf]
    %v778 = vld [vmem:[#allocation14 + $0x38] sm:$0xf]
    %v779 = vld [vmem:[#allocation14 + $0x3c] sm:$0xf]
    %v780 = vld [vmem:[%s9] sm:$0x1]
    %v782 = vlaneseq
    %v783 = vshrl.u32 %v782, 7
    %v784 = vsub.s32 0, %v783
    %v785 = vrot.slane %v780, %v784
    %v803 = vunpack.c.l.b16 %v764
    %v804 = vunpack.c.l.b16 %v765
    %v805 = vunpack.c.l.b16 %v766
    %v806 = vunpack.c.l.b16 %v767
    %v807 = vunpack.c.l.b16 %v768
    %v808 = vunpack.c.l.b16 %v769
    %v809 = vunpack.c.l.b16 %v770
    %v810 = vunpack.c.l.b16 %v771
    %v811 = vunpack.c.l.b16 %v772
    %v812 = vunpack.c.l.b16 %v773
    %v813 = vunpack.c.l.b16 %v774
    %v814 = vunpack.c.l.b16 %v775
    %v815 = vunpack.c.l.b16 %v776
    %v816 = vunpack.c.l.b16 %v777
    %v817 = vunpack.c.l.b16 %v778
    %v818 = vunpack.c.l.b16 %v779
    %v819 = vpack.c.b16 %v804, %v803
    %v820 = vpack.c.b16 %v806, %v805
    %v821 = vpack.c.b16 %v808, %v807
    %v822 = vpack.c.b16 %v810, %v809
    %v823 = vpack.c.b16 %v812, %v811
    %v824 = vpack.c.b16 %v814, %v813
    %v825 = vpack.c.b16 %v816, %v815
    %v826 = vpack.c.b16 %v818, %v817
    %835 = vmatprep.subr.bf16.mxu0 0
    %836 = vmatpush1.bf16.msra.mxu0 %v819
    %837 = vmatprep.subr.bf16.mxu0 0
    %838 = vmatpush1.bf16.msra.mxu0 %v820
    %839 = vmatprep.subr.bf16.mxu0 0
    %840 = vmatpush1.bf16.msra.mxu0 %v821
    %841 = vmatprep.subr.bf16.mxu0 0
    %842 = vmatpush1.bf16.msra.mxu0 %v822
    %843 = vmatprep.subr.bf16.mxu0 0
    %844 = vmatpush1.bf16.msra.mxu0 %v823
    %845 = vmatprep.subr.bf16.mxu0 0
    %846 = vmatpush1.bf16.msra.mxu0 %v824
    %847 = vmatprep.subr.bf16.mxu0 0
    %848 = vmatpush1.bf16.msra.mxu0 %v825
    %849 = vmatprep.subr.bf16.mxu0 0
    %850 = vmatpush1.bf16.msra.mxu0 %v826
    %851 = vmatprep.subr.bf16.mxu0 0
    %852 = vmatpush1.bf16.msra.mxu0 0
    %853 = vmatprep.subr.bf16.mxu0 0
    %854 = vmatpush1.bf16.msra.mxu0 0
    %855 = vmatprep.subr.bf16.mxu0 0
    %856 = vmatpush1.bf16.msra.mxu0 0
    %857 = vmatprep.subr.bf16.mxu0 0
    %858 = vmatpush1.bf16.msra.mxu0 0
    %859 = vmatprep.subr.bf16.mxu0 0
    %860 = vmatpush1.bf16.msra.mxu0 0
    %861 = vmatprep.subr.bf16.mxu0 0
    %862 = vmatpush1.bf16.msra.mxu0 0
    %863 = vmatprep.subr.bf16.mxu0 0
    %864 = vmatpush1.bf16.msra.mxu0 0
    %865 = vmatprep.subr.bf16.mxu0 0
    %866 = vmatpush1.bf16.msra.mxu0 0
    %867 = vmatprep.mubr.bf16.mxu0 0
    %868 = vmatmul.mubr.bf16.gmra.mrb[0].mxu0 %v760
    %v869 = vpop.f32.mrb[0].mxu0
    %v870 = vadd.f32 %v785, %v869
    %v871 = vpop.f32.mrb[0].mxu0
    %v872 = vpop.f32.mrb[0].mxu0
    %v873 = vadd.f32 %v785, %v872
    %v874 = vpop.f32.mrb[0].mxu0
    %875 = vmatprep.mubr.bf16.mxu0 0
    %876 = vmatmul.mubr.bf16.gmra.mrb[0].mxu0 %v761
    %v877 = vpop.f32.mrb[0].mxu0
    %v878 = vadd.f32 %v785, %v877
    %v879 = vpop.f32.mrb[0].mxu0
    %v880 = vpop.f32.mrb[0].mxu0
    %v881 = vadd.f32 %v785, %v880
    %v882 = vpop.f32.mrb[0].mxu0
    %883 = vmatprep.mubr.bf16.mxu0 0
    %884 = vmatmul.mubr.bf16.gmra.mrb[0].mxu0 %v762
    %v885 = vpop.f32.mrb[0].mxu0
    %v886 = vadd.f32 %v785, %v885
    %v887 = vpop.f32.mrb[0].mxu0
    %v888 = vpop.f32.mrb[0].mxu0
    %v889 = vadd.f32 %v785, %v888
    %v890 = vpop.f32.mrb[0].mxu0
    %891 = vmatprep.mubr.bf16.mxu0 0
    %892 = vmatmul.mubr.bf16.gmra.mrb[0].mxu0 %v763
    %v893 = vpop.f32.mrb[0].mxu0
    %v894 = vadd.f32 %v785, %v893
    %v895 = vpop.f32.mrb[0].mxu0
    %v896 = vpop.f32.mrb[0].mxu0
    %v897 = vadd.f32 %v785, %v896
    %v898 = vpop.f32.mrb[0].mxu0
    %899 = vdwg.mxu0
    %v900 = vxor.u32 %v870, 2147483648
    %v901 = vxor.u32 %v873, 2147483648
    %v902 = vxor.u32 %v878, 2147483648
    %v903 = vxor.u32 %v881, 2147483648
    %v904 = vxor.u32 %v886, 2147483648
    %v905 = vxor.u32 %v889, 2147483648
    %v906 = vxor.u32 %v894, 2147483648
    %v907 = vxor.u32 %v897, 2147483648
    %v908 = vmul.f32 %v900, 1.442695
    %v909 = vpow.pop %v908
    %v910 = vmul.f32 %v901, 1.442695
    %v911 = vpow.pop %v910
    %v912 = vmul.f32 %v902, 1.442695
    %v913 = vpow.pop %v912
    %v914 = vmul.f32 %v903, 1.442695
    %v915 = vpow.pop %v914
    %v916 = vmul.f32 %v904, 1.442695
    %v917 = vpow.pop %v916
    %v918 = vmul.f32 %v905, 1.442695
    %v919 = vpow.pop %v918
    %v920 = vmul.f32 %v906, 1.442695
    %v921 = vpow.pop %v920
    %v922 = vmul.f32 %v907, 1.442695
    %v923 = vpow.pop %v922
    %v924 = vadd.f32 %v909, 1.0
    %v925 = vadd.f32 %v911, 1.0
    %v926 = vadd.f32 %v913, 1.0
    %v927 = vadd.f32 %v915, 1.0
    %v928 = vadd.f32 %v917, 1.0
    %v929 = vadd.f32 %v919, 1.0
    %v930 = vadd.f32 %v921, 1.0
    %v931 = vadd.f32 %v923, 1.0
    %v932 = vrcp.pop %v924
    %v933 = vmul.f32 1.0, %v932
    %v934 = vrcp.pop %v925
    %v935 = vmul.f32 1.0, %v934
    %v936 = vrcp.pop %v926
    %v937 = vmul.f32 1.0, %v936
    %v938 = vrcp.pop %v927
    %v939 = vmul.f32 1.0, %v938
    %v940 = vrcp.pop %v928
    %v941 = vmul.f32 1.0, %v940
    %v942 = vrcp.pop %v929
    %v943 = vmul.f32 1.0, %v942
    %v944 = vrcp.pop %v930
    %v945 = vmul.f32 1.0, %v944
    %v946 = vrcp.pop %v931
    %v947 = vmul.f32 1.0, %v946
    %v948 = vmul.f32 %v870, %v933
    %v949 = vmul.f32 %v873, %v935
    %v950 = vmul.f32 %v878, %v937
    %v951 = vmul.f32 %v881, %v939
    %v952 = vmul.f32 %v886, %v941
    %v953 = vmul.f32 %v889, %v943
    %v954 = vmul.f32 %v894, %v945
    %v955 = vmul.f32 %v897, %v947
    %v956 = vpack.c.bf16 %v949, %v948
    %v957 = vpack.c.bf16 %v951, %v950
    %v958 = vpack.c.bf16 %v953, %v952
    %v959 = vpack.c.bf16 %v955, %v954
    %v960 = vld [vmem:[#allocation16] sm:$0xf]
    %v961 = vld [vmem:[#allocation16 + $0x4] sm:$0xf]
    %v962 = vld [vmem:[#allocation16 + $0x8] sm:$0xf]
    %v963 = vld [vmem:[#allocation16 + $0xc] sm:$0xf]
    %v964 = vld [vmem:[#allocation16 + $0x10] sm:$0xf]
    %v965 = vld [vmem:[#allocation16 + $0x14] sm:$0xf]
    %v966 = vld [vmem:[#allocation16 + $0x18] sm:$0xf]
    %v967 = vld [vmem:[#allocation16 + $0x1c] sm:$0xf]
    %v968 = vld [vmem:[#allocation16 + $0x20] sm:$0xf]
    %v969 = vld [vmem:[#allocation16 + $0x24] sm:$0xf]
    %v970 = vld [vmem:[#allocation16 + $0x28] sm:$0xf]
    %v971 = vld [vmem:[#allocation16 + $0x2c] sm:$0xf]
    %v972 = vld [vmem:[#allocation16 + $0x30] sm:$0xf]
    %v973 = vld [vmem:[#allocation16 + $0x34] sm:$0xf]
    %v974 = vld [vmem:[#allocation16 + $0x38] sm:$0xf]
    %v975 = vld [vmem:[#allocation16 + $0x3c] sm:$0xf]
    %v976 = vld [vmem:[%s11] sm:$0x1]
    %v978 = vlaneseq
    %v979 = vshrl.u32 %v978, 7
    %v980 = vsub.s32 0, %v979
    %v981 = vrot.slane %v976, %v980
    %v999 = vunpack.c.l.b16 %v960
    %v1000 = vunpack.c.l.b16 %v961
    %v1001 = vunpack.c.l.b16 %v962
    %v1002 = vunpack.c.l.b16 %v963
    %v1003 = vunpack.c.l.b16 %v964
    %v1004 = vunpack.c.l.b16 %v965
    %v1005 = vunpack.c.l.b16 %v966
    %v1006 = vunpack.c.l.b16 %v967
    %v1007 = vunpack.c.l.b16 %v968
    %v1008 = vunpack.c.l.b16 %v969
    %v1009 = vunpack.c.l.b16 %v970
    %v1010 = vunpack.c.l.b16 %v971
    %v1011 = vunpack.c.l.b16 %v972
    %v1012 = vunpack.c.l.b16 %v973
    %v1013 = vunpack.c.l.b16 %v974
    %v1014 = vunpack.c.l.b16 %v975
    %v1015 = vpack.c.b16 %v1000, %v999
    %v1016 = vpack.c.b16 %v1002, %v1001
    %v1017 = vpack.c.b16 %v1004, %v1003
    %v1018 = vpack.c.b16 %v1006, %v1005
    %v1019 = vpack.c.b16 %v1008, %v1007
    %v1020 = vpack.c.b16 %v1010, %v1009
    %v1021 = vpack.c.b16 %v1012, %v1011
    %v1022 = vpack.c.b16 %v1014, %v1013
    %1031 = vmatprep.subr.bf16.mxu0 0
    %1032 = vmatpush1.bf16.msra.mxu0 %v1015
    %1033 = vmatprep.subr.bf16.mxu0 0
    %1034 = vmatpush1.bf16.msra.mxu0 %v1016
    %1035 = vmatprep.subr.bf16.mxu0 0
    %1036 = vmatpush1.bf16.msra.mxu0 %v1017
    %1037 = vmatprep.subr.bf16.mxu0 0
    %1038 = vmatpush1.bf16.msra.mxu0 %v1018
    %1039 = vmatprep.subr.bf16.mxu0 0
    %1040 = vmatpush1.bf16.msra.mxu0 %v1019
    %1041 = vmatprep.subr.bf16.mxu0 0
    %1042 = vmatpush1.bf16.msra.mxu0 %v1020
    %1043 = vmatprep.subr.bf16.mxu0 0
    %1044 = vmatpush1.bf16.msra.mxu0 %v1021
    %1045 = vmatprep.subr.bf16.mxu0 0
    %1046 = vmatpush1.bf16.msra.mxu0 %v1022
    %1047 = vmatprep.subr.bf16.mxu0 0
    %1048 = vmatpush1.bf16.msra.mxu0 0
    %1049 = vmatprep.subr.bf16.mxu0 0
    %1050 = vmatpush1.bf16.msra.mxu0 0
    %1051 = vmatprep.subr.bf16.mxu0 0
    %1052 = vmatpush1.bf16.msra.mxu0 0
    %1053 = vmatprep.subr.bf16.mxu0 0
    %1054 = vmatpush1.bf16.msra.mxu0 0
    %1055 = vmatprep.subr.bf16.mxu0 0
    %1056 = vmatpush1.bf16.msra.mxu0 0
    %1057 = vmatprep.subr.bf16.mxu0 0
    %1058 = vmatpush1.bf16.msra.mxu0 0
    %1059 = vmatprep.subr.bf16.mxu0 0
    %1060 = vmatpush1.bf16.msra.mxu0 0
    %1061 = vmatprep.subr.bf16.mxu0 0
    %1062 = vmatpush1.bf16.msra.mxu0 0
    %1063 = vmatprep.mubr.bf16.mxu0 0
    %1064 = vmatmul.mubr.bf16.gmra.mrb[0].mxu0 %v956
    %v1065 = vpop.f32.mrb[0].mxu0
    %v1066 = vadd.f32 %v981, %v1065
    %v1067 = vpop.f32.mrb[0].mxu0
    %v1068 = vpop.f32.mrb[0].mxu0
    %v1069 = vadd.f32 %v981, %v1068
    %v1070 = vpop.f32.mrb[0].mxu0
    %1071 = vmatprep.mubr.bf16.mxu0 0
    %1072 = vmatmul.mubr.bf16.gmra.mrb[0].mxu0 %v957
    %v1073 = vpop.f32.mrb[0].mxu0
    %v1074 = vadd.f32 %v981, %v1073
    %v1075 = vpop.f32.mrb[0].mxu0
    %v1076 = vpop.f32.mrb[0].mxu0
    %v1077 = vadd.f32 %v981, %v1076
    %v1078 = vpop.f32.mrb[0].mxu0
    %1079 = vmatprep.mubr.bf16.mxu0 0
    %1080 = vmatmul.mubr.bf16.gmra.mrb[0].mxu0 %v958
    %v1081 = vpop.f32.mrb[0].mxu0
    %v1082 = vadd.f32 %v981, %v1081
    %v1083 = vpop.f32.mrb[0].mxu0
    %v1084 = vpop.f32.mrb[0].mxu0
    %v1085 = vadd.f32 %v981, %v1084
    %v1086 = vpop.f32.mrb[0].mxu0
    %1087 = vmatprep.mubr.bf16.mxu0 0
    %1088 = vmatmul.mubr.bf16.gmra.mrb[0].mxu0 %v959
    %v1089 = vpop.f32.mrb[0].mxu0
    %v1090 = vadd.f32 %v981, %v1089
    %v1091 = vpop.f32.mrb[0].mxu0
    %v1092 = vpop.f32.mrb[0].mxu0
    %v1093 = vadd.f32 %v981, %v1092
    %v1094 = vpop.f32.mrb[0].mxu0
    %1095 = vdwg.mxu0
    %v1096 = vxor.u32 %v1066, 2147483648
    %v1097 = vxor.u32 %v1069, 2147483648
    %v1098 = vxor.u32 %v1074, 2147483648
    %v1099 = vxor.u32 %v1077, 2147483648
    %v1100 = vxor.u32 %v1082, 2147483648
    %v1101 = vxor.u32 %v1085, 2147483648
    %v1102 = vxor.u32 %v1090, 2147483648
    %v1103 = vxor.u32 %v1093, 2147483648
    %v1104 = vmul.f32 %v1096, 1.442695
    %v1105 = vpow.pop %v1104
    %v1106 = vmul.f32 %v1097, 1.442695
    %v1107 = vpow.pop %v1106
    %v1108 = vmul.f32 %v1098, 1.442695
    %v1109 = vpow.pop %v1108
    %v1110 = vmul.f32 %v1099, 1.442695
    %v1111 = vpow.pop %v1110
    %v1112 = vmul.f32 %v1100, 1.442695
    %v1113 = vpow.pop %v1112
    %v1114 = vmul.f32 %v1101, 1.442695
    %v1115 = vpow.pop %v1114
    %v1116 = vmul.f32 %v1102, 1.442695
    %v1117 = vpow.pop %v1116
    %v1118 = vmul.f32 %v1103, 1.442695
    %v1119 = vpow.pop %v1118
    %v1120 = vadd.f32 %v1105, 1.0
    %v1121 = vadd.f32 %v1107, 1.0
    %v1122 = vadd.f32 %v1109, 1.0
    %v1123 = vadd.f32 %v1111, 1.0
    %v1124 = vadd.f32 %v1113, 1.0
    %v1125 = vadd.f32 %v1115, 1.0
    %v1126 = vadd.f32 %v1117, 1.0
    %v1127 = vadd.f32 %v1119, 1.0
    %v1128 = vrcp.pop %v1120
    %v1129 = vmul.f32 1.0, %v1128
    %v1130 = vrcp.pop %v1121
    %v1131 = vmul.f32 1.0, %v1130
    %v1132 = vrcp.pop %v1122
    %v1133 = vmul.f32 1.0, %v1132
    %v1134 = vrcp.pop %v1123
    %v1135 = vmul.f32 1.0, %v1134
    %v1136 = vrcp.pop %v1124
    %v1137 = vmul.f32 1.0, %v1136
    %v1138 = vrcp.pop %v1125
    %v1139 = vmul.f32 1.0, %v1138
    %v1140 = vrcp.pop %v1126
    %v1141 = vmul.f32 1.0, %v1140
    %v1142 = vrcp.pop %v1127
    %v1143 = vmul.f32 1.0, %v1142
    %v1144 = vmul.f32 %v1066, %v1129
    %v1145 = vmul.f32 %v1069, %v1131
    %v1146 = vmul.f32 %v1074, %v1133
    %v1147 = vmul.f32 %v1077, %v1135
    %v1148 = vmul.f32 %v1082, %v1137
    %v1149 = vmul.f32 %v1085, %v1139
    %v1150 = vmul.f32 %v1090, %v1141
    %v1151 = vmul.f32 %v1093, %v1143
    %v1152 = vld [vmem:[%s12] sm:$0x1]
    %v1154 = vlaneseq
    %v1155 = vshrl.u32 %v1154, 7
    %v1156 = vsub.s32 0, %v1155
    %v1157 = vrot.slane %v1152, %v1156
    %v1159 = vmul.f32 %v1144, %v1157
    %v1160 = vmul.f32 %v1145, %v1157
    %v1161 = vmul.f32 %v1146, %v1157
    %v1162 = vmul.f32 %v1147, %v1157
    %v1163 = vmul.f32 %v1148, %v1157
    %v1164 = vmul.f32 %v1149, %v1157
    %v1165 = vmul.f32 %v1150, %v1157
    %v1166 = vmul.f32 %v1151, %v1157
    %1167 = vadd.xlane.f32.xlu0 %v1159
    %v1168 = vpop.xlane.xlu0 %1167
    %1169 = vadd.xlane.f32.xlu0 %v1160
    %v1170 = vpop.xlane.xlu0 %1169
    %1171 = vadd.xlane.f32.xlu0 %v1161
    %v1172 = vpop.xlane.xlu0 %1171
    %1173 = vadd.xlane.f32.xlu0 %v1162
    %v1174 = vpop.xlane.xlu0 %1173
    %1175 = vadd.xlane.f32.xlu0 %v1163
    %v1176 = vpop.xlane.xlu0 %1175
    %1177 = vadd.xlane.f32.xlu0 %v1164
    %v1178 = vpop.xlane.xlu0 %1177
    %1179 = vadd.xlane.f32.xlu0 %v1165
    %v1180 = vpop.xlane.xlu0 %1179
    %1181 = vadd.xlane.f32.xlu0 %v1166
    %v1182 = vpop.xlane.xlu0 %1181
    %v1183 = vld [vmem:[#allocation3] sm:$0xff]
    %v1184 = vmul.f32 %v1168, %v407
    %v1185 = vmul.f32 %v1170, %v408
    %v1186 = vmul.f32 %v1172, %v409
    %v1187 = vmul.f32 %v1174, %v410
    %v1188 = vmul.f32 %v1176, %v411
    %v1189 = vmul.f32 %v1178, %v412
    %v1190 = vmul.f32 %v1180, %v413
    %v1191 = vmul.f32 %v1182, %v414
    %v1192 = vadd.f32 %v1184, %v1185
    %v1193 = vadd.f32 %v1192, %v1186
    %v1194 = vadd.f32 %v1193, %v1187
    %v1195 = vadd.f32 %v1194, %v1188
    %v1196 = vadd.f32 %v1195, %v1189
    %v1197 = vadd.f32 %v1196, %v1190
    %v1198 = vadd.f32 %v1197, %v1191
    %v1199 = vadd.f32 %v1183, %v1198
    %1200 = vst [vmem:[#allocation3] sm:$0xff] %v1199
    %v1201 = vld [vmem:[#allocation2] sm:$0xff]
    %v1202 = vmul.f32 %v469, %v948
    %v1203 = vmul.f32 %v470, %v949
    %v1204 = vmul.f32 %v471, %v950
    %v1205 = vmul.f32 %v472, %v951
    %v1206 = vmul.f32 %v473, %v952
    %v1207 = vmul.f32 %v474, %v953
    %v1208 = vmul.f32 %v475, %v954
    %v1209 = vmul.f32 %v476, %v955
    %v1210 = vadd.f32 %v1202, %v1203
    %v1211 = vadd.f32 %v1210, %v1204
    %v1212 = vadd.f32 %v1211, %v1205
    %v1213 = vadd.f32 %v1212, %v1206
    %v1214 = vadd.f32 %v1213, %v1207
    %v1215 = vadd.f32 %v1214, %v1208
    %v1216 = vadd.f32 %v1215, %v1209
    %v1217 = vadd.f32 %v1201, %v1216
    %1218 = vst [vmem:[#allocation2] sm:$0xff] %v1217
    // Predicated region
    $region118: #{tpu_custom_call.1} parent=1 // pred_check
      %p1219 = pneg %p195
    $region119: #{tpu_custom_call.1} parent=1 // pred_check_branch
      %1221 = sbr.rel (%p1219) target = $region121
    $region120: #{tpu_custom_call.1} parent=1 // pred_region
      %v1222 = vld [vmem:[#allocation3] sm:$0xff]
      %v1223 = vmul.f32 %v1222, 0.14285715
      %v1224 = vadd.f32 %v314, %v1223
      %1225 = vst [vmem:[#allocation22] sm:$0xff] %v1224
      %v1226 = vld [vmem:[#allocation2] sm:$0xff]
      %v1227 = vpack.c.bf16 %v194, %v194
      %v1228 = vld [vmem:[#allocation17] sm:$0xf]
      %v1229 = vld [vmem:[#allocation17 + $0x4] sm:$0xf]
      %v1230 = vld [vmem:[#allocation17 + $0x8] sm:$0xf]
      %v1231 = vld [vmem:[#allocation17 + $0xc] sm:$0xf]
      %v1232 = vld [vmem:[#allocation17 + $0x10] sm:$0xf]
      %v1233 = vld [vmem:[#allocation17 + $0x14] sm:$0xf]
      %v1234 = vld [vmem:[#allocation17 + $0x18] sm:$0xf]
      %v1235 = vld [vmem:[#allocation17 + $0x1c] sm:$0xf]
      %v1236 = vld [vmem:[#allocation17 + $0x20] sm:$0xf]
      %v1237 = vld [vmem:[#allocation17 + $0x24] sm:$0xf]
      %v1238 = vld [vmem:[#allocation17 + $0x28] sm:$0xf]
      %v1239 = vld [vmem:[#allocation17 + $0x2c] sm:$0xf]
      %v1240 = vld [vmem:[#allocation17 + $0x30] sm:$0xf]
      %v1241 = vld [vmem:[#allocation17 + $0x34] sm:$0xf]
      %v1242 = vld [vmem:[#allocation17 + $0x38] sm:$0xf]
      %v1243 = vld [vmem:[#allocation17 + $0x3c] sm:$0xf]
      %v1244 = vpack.c.bf16 %v1226, %v1226
      %v1245 = vld [vmem:[#allocation19] sm:$0xf]
      %v1246 = vld [vmem:[#allocation19 + $0x4] sm:$0xf]
      %v1247 = vld [vmem:[#allocation19 + $0x8] sm:$0xf]
      %v1248 = vld [vmem:[#allocation19 + $0xc] sm:$0xf]
      %v1249 = vld [vmem:[#allocation19 + $0x10] sm:$0xf]
      %v1250 = vld [vmem:[#allocation19 + $0x14] sm:$0xf]
      %v1251 = vld [vmem:[#allocation19 + $0x18] sm:$0xf]
      %v1252 = vld [vmem:[#allocation19 + $0x1c] sm:$0xf]
      %v1253 = vld [vmem:[#allocation19 + $0x20] sm:$0xf]
      %v1254 = vld [vmem:[#allocation19 + $0x24] sm:$0xf]
      %v1255 = vld [vmem:[#allocation19 + $0x28] sm:$0xf]
      %v1256 = vld [vmem:[#allocation19 + $0x2c] sm:$0xf]
      %v1257 = vld [vmem:[#allocation19 + $0x30] sm:$0xf]
      %v1258 = vld [vmem:[#allocation19 + $0x34] sm:$0xf]
      %v1259 = vld [vmem:[#allocation19 + $0x38] sm:$0xf]
      %v1260 = vld [vmem:[#allocation19 + $0x3c] sm:$0xf]
      %v1277 = vunpack.c.l.b16 %v1245
      %v1278 = vunpack.c.l.b16 %v1246
      %v1279 = vunpack.c.l.b16 %v1247
      %v1280 = vunpack.c.l.b16 %v1248
      %v1281 = vunpack.c.l.b16 %v1249
      %v1282 = vunpack.c.l.b16 %v1250
      %v1283 = vunpack.c.l.b16 %v1251
      %v1284 = vunpack.c.l.b16 %v1252
      %v1285 = vunpack.c.l.b16 %v1253
      %v1286 = vunpack.c.l.b16 %v1254
      %v1287 = vunpack.c.l.b16 %v1255
      %v1288 = vunpack.c.l.b16 %v1256
      %v1289 = vunpack.c.l.b16 %v1257
      %v1290 = vunpack.c.l.b16 %v1258
      %v1291 = vunpack.c.l.b16 %v1259
      %v1292 = vunpack.c.l.b16 %v1260
      %v1293 = vpack.c.b16 %v1278, %v1277
      %v1294 = vpack.c.b16 %v1280, %v1279
      %v1295 = vpack.c.b16 %v1282, %v1281
      %v1296 = vpack.c.b16 %v1284, %v1283
      %v1297 = vpack.c.b16 %v1286, %v1285
      %v1298 = vpack.c.b16 %v1288, %v1287
      %v1299 = vpack.c.b16 %v1290, %v1289
      %v1300 = vpack.c.b16 %v1292, %v1291
      %1309 = vmatprep.subr.bf16.mxu0 0
      %1310 = vmatpush1.bf16.msra.mxu0 %v1293
      %1311 = vmatprep.subr.bf16.mxu0 0
      %1312 = vmatpush1.bf16.msra.mxu0 %v1294
      %1313 = vmatprep.subr.bf16.mxu0 0
      %1314 = vmatpush1.bf16.msra.mxu0 %v1295
      %1315 = vmatprep.subr.bf16.mxu0 0
      %1316 = vmatpush1.bf16.msra.mxu0 %v1296
      %1317 = vmatprep.subr.bf16.mxu0 0
      %1318 = vmatpush1.bf16.msra.mxu0 %v1297
      %1319 = vmatprep.subr.bf16.mxu0 0
      %1320 = vmatpush1.bf16.msra.mxu0 %v1298
      %1321 = vmatprep.subr.bf16.mxu0 0
      %1322 = vmatpush1.bf16.msra.mxu0 %v1299
      %1323 = vmatprep.subr.bf16.mxu0 0
      %1324 = vmatpush1.bf16.msra.mxu0 %v1300
      %1325 = vmatprep.subr.bf16.mxu0 0
      %1326 = vmatpush1.bf16.msra.mxu0 0
      %1327 = vmatprep.subr.bf16.mxu0 0
      %1328 = vmatpush1.bf16.msra.mxu0 0
      %1329 = vmatprep.subr.bf16.mxu0 0
      %1330 = vmatpush1.bf16.msra.mxu0 0
      %1331 = vmatprep.subr.bf16.mxu0 0
      %1332 = vmatpush1.bf16.msra.mxu0 0
      %1333 = vmatprep.subr.bf16.mxu0 0
      %1334 = vmatpush1.bf16.msra.mxu0 0
      %1335 = vmatprep.subr.bf16.mxu0 0
      %1336 = vmatpush1.bf16.msra.mxu0 0
      %1337 = vmatprep.subr.bf16.mxu0 0
      %1338 = vmatpush1.bf16.msra.mxu0 0
      %1339 = vmatprep.subr.bf16.mxu0 0
      %1340 = vmatpush1.bf16.msra.mxu0 0
      %1341 = vmatprep.mubr.bf16.mxu0 0
      %1342 = vmatmul.mubr.bf16.gmra.mrb[0].mxu0 %v1244
      %v1343 = vpop.f32.mrb[0].mxu0
      %v1344 = vadd.f32 0.0, %v1343
      %v1345 = vpop.f32.mrb[0].mxu0
      %v1346 = vpop.f32.mrb[0].mxu0
      %v1347 = vpop.f32.mrb[0].mxu0
      %1348 = vdwg.mxu0
      %v1365 = vunpack.c.l.b16 %v1228
      %v1366 = vunpack.c.l.b16 %v1229
      %v1367 = vunpack.c.l.b16 %v1230
      %v1368 = vunpack.c.l.b16 %v1231
      %v1369 = vunpack.c.l.b16 %v1232
      %v1370 = vunpack.c.l.b16 %v1233
      %v1371 = vunpack.c.l.b16 %v1234
      %v1372 = vunpack.c.l.b16 %v1235
      %v1373 = vunpack.c.l.b16 %v1236
      %v1374 = vunpack.c.l.b16 %v1237
      %v1375 = vunpack.c.l.b16 %v1238
      %v1376 = vunpack.c.l.b16 %v1239
      %v1377 = vunpack.c.l.b16 %v1240
      %v1378 = vunpack.c.l.b16 %v1241
      %v1379 = vunpack.c.l.b16 %v1242
      %v1380 = vunpack.c.l.b16 %v1243
      %v1381 = vpack.c.b16 %v1366, %v1365
      %v1382 = vpack.c.b16 %v1368, %v1367
      %v1383 = vpack.c.b16 %v1370, %v1369
      %v1384 = vpack.c.b16 %v1372, %v1371
      %v1385 = vpack.c.b16 %v1374, %v1373
      %v1386 = vpack.c.b16 %v1376, %v1375
      %v1387 = vpack.c.b16 %v1378, %v1377
      %v1388 = vpack.c.b16 %v1380, %v1379
      %1397 = vmatprep.subr.bf16.mxu0 0
      %1398 = vmatpush1.bf16.msra.mxu0 %v1381
      %1399 = vmatprep.subr.bf16.mxu0 0
      %1400 = vmatpush1.bf16.msra.mxu0 %v1382
      %1401 = vmatprep.subr.bf16.mxu0 0
      %1402 = vmatpush1.bf16.msra.mxu0 %v1383
      %1403 = vmatprep.subr.bf16.mxu0 0
      %1404 = vmatpush1.bf16.msra.mxu0 %v1384
      %1405 = vmatprep.subr.bf16.mxu0 0
      %1406 = vmatpush1.bf16.msra.mxu0 %v1385
      %1407 = vmatprep.subr.bf16.mxu0 0
      %1408 = vmatpush1.bf16.msra.mxu0 %v1386
      %1409 = vmatprep.subr.bf16.mxu0 0
      %1410 = vmatpush1.bf16.msra.mxu0 %v1387
      %1411 = vmatprep.subr.bf16.mxu0 0
      %1412 = vmatpush1.bf16.msra.mxu0 %v1388
      %1413 = vmatprep.subr.bf16.mxu0 0
      %1414 = vmatpush1.bf16.msra.mxu0 0
      %1415 = vmatprep.subr.bf16.mxu0 0
      %1416 = vmatpush1.bf16.msra.mxu0 0
      %1417 = vmatprep.subr.bf16.mxu0 0
      %1418 = vmatpush1.bf16.msra.mxu0 0
      %1419 = vmatprep.subr.bf16.mxu0 0
      %1420 = vmatpush1.bf16.msra.mxu0 0
      %1421 = vmatprep.subr.bf16.mxu0 0
      %1422 = vmatpush1.bf16.msra.mxu0 0
      %1423 = vmatprep.subr.bf16.mxu0 0
      %1424 = vmatpush1.bf16.msra.mxu0 0
      %1425 = vmatprep.subr.bf16.mxu0 0
      %1426 = vmatpush1.bf16.msra.mxu0 0
      %1427 = vmatprep.subr.bf16.mxu0 0
      %1428 = vmatpush1.bf16.msra.mxu0 0
      %1429 = vmatprep.mubr.bf16.mxu0 0
      %1430 = vmatmul.mubr.bf16.gmra.mrb[0].mxu0 %v1227
      %v1431 = vpop.f32.mrb[0].mxu0
      %v1432 = vadd.f32 %v1344, %v1431
      %v1433 = vpop.f32.mrb[0].mxu0
      %v1434 = vpop.f32.mrb[0].mxu0
      %v1435 = vpop.f32.mrb[0].mxu0
      %1436 = vdwg.mxu0
      %v1437 = vld [vmem:[%s15] sm:$0x1]
      %v1439 = vlaneseq
      %v1440 = vshrl.u32 %v1439, 7
      %v1441 = vsub.s32 0, %v1440
      %v1442 = vrot.slane %v1437, %v1441
      %v1444 = vadd.f32 %v1432, %v1442
      %v1445 = vxor.u32 %v1444, 2147483648
      %v1446 = vmul.f32 %v1445, 1.442695
      %v1447 = vpow.pop %v1446
      %v1448 = vadd.f32 %v1447, 1.0
      %v1449 = vrcp.pop %v1448
      %v1450 = vmul.f32 1.0, %v1449
      %v1451 = vmul.f32 %v1444, %v1450
      %v1452 = vpack.c.bf16 %v1451, %v1451
      %v1453 = vld [vmem:[#allocation20] sm:$0xf]
      %v1454 = vld [vmem:[#allocation20 + $0x4] sm:$0xf]
      %v1455 = vld [vmem:[#allocation20 + $0x8] sm:$0xf]
      %v1456 = vld [vmem:[#allocation20 + $0xc] sm:$0xf]
      %v1457 = vld [vmem:[#allocation20 + $0x10] sm:$0xf]
      %v1458 = vld [vmem:[#allocation20 + $0x14] sm:$0xf]
      %v1459 = vld [vmem:[#allocation20 + $0x18] sm:$0xf]
      %v1460 = vld [vmem:[#allocation20 + $0x1c] sm:$0xf]
      %v1461 = vld [vmem:[#allocation20 + $0x20] sm:$0xf]
      %v1462 = vld [vmem:[#allocation20 + $0x24] sm:$0xf]
      %v1463 = vld [vmem:[#allocation20 + $0x28] sm:$0xf]
      %v1464 = vld [vmem:[#allocation20 + $0x2c] sm:$0xf]
      %v1465 = vld [vmem:[#allocation20 + $0x30] sm:$0xf]
      %v1466 = vld [vmem:[#allocation20 + $0x34] sm:$0xf]
      %v1467 = vld [vmem:[#allocation20 + $0x38] sm:$0xf]
      %v1468 = vld [vmem:[#allocation20 + $0x3c] sm:$0xf]
      %v1469 = vld [vmem:[%s17] sm:$0x1]
      %v1471 = vlaneseq
      %v1472 = vshrl.u32 %v1471, 7
      %v1473 = vsub.s32 0, %v1472
      %v1474 = vrot.slane %v1469, %v1473
      %v1492 = vunpack.c.l.b16 %v1453
      %v1493 = vunpack.c.l.b16 %v1454
      %v1494 = vunpack.c.l.b16 %v1455
      %v1495 = vunpack.c.l.b16 %v1456
      %v1496 = vunpack.c.l.b16 %v1457
      %v1497 = vunpack.c.l.b16 %v1458
      %v1498 = vunpack.c.l.b16 %v1459
      %v1499 = vunpack.c.l.b16 %v1460
      %v1500 = vunpack.c.l.b16 %v1461
      %v1501 = vunpack.c.l.b16 %v1462
      %v1502 = vunpack.c.l.b16 %v1463
      %v1503 = vunpack.c.l.b16 %v1464
      %v1504 = vunpack.c.l.b16 %v1465
      %v1505 = vunpack.c.l.b16 %v1466
      %v1506 = vunpack.c.l.b16 %v1467
      %v1507 = vunpack.c.l.b16 %v1468
      %v1508 = vpack.c.b16 %v1493, %v1492
      %v1509 = vpack.c.b16 %v1495, %v1494
      %v1510 = vpack.c.b16 %v1497, %v1496
      %v1511 = vpack.c.b16 %v1499, %v1498
      %v1512 = vpack.c.b16 %v1501, %v1500
      %v1513 = vpack.c.b16 %v1503, %v1502
      %v1514 = vpack.c.b16 %v1505, %v1504
      %v1515 = vpack.c.b16 %v1507, %v1506
      %1524 = vmatprep.subr.bf16.mxu0 0
      %1525 = vmatpush1.bf16.msra.mxu0 %v1508
      %1526 = vmatprep.subr.bf16.mxu0 0
      %1527 = vmatpush1.bf16.msra.mxu0 %v1509
      %1528 = vmatprep.subr.bf16.mxu0 0
      %1529 = vmatpush1.bf16.msra.mxu0 %v1510
      %1530 = vmatprep.subr.bf16.mxu0 0
      %1531 = vmatpush1.bf16.msra.mxu0 %v1511
      %1532 = vmatprep.subr.bf16.mxu0 0
      %1533 = vmatpush1.bf16.msra.mxu0 %v1512
      %1534 = vmatprep.subr.bf16.mxu0 0
      %1535 = vmatpush1.bf16.msra.mxu0 %v1513
      %1536 = vmatprep.subr.bf16.mxu0 0
      %1537 = vmatpush1.bf16.msra.mxu0 %v1514
      %1538 = vmatprep.subr.bf16.mxu0 0
      %1539 = vmatpush1.bf16.msra.mxu0 %v1515
      %1540 = vmatprep.subr.bf16.mxu0 0
      %1541 = vmatpush1.bf16.msra.mxu0 0
      %1542 = vmatprep.subr.bf16.mxu0 0
      %1543 = vmatpush1.bf16.msra.mxu0 0
      %1544 = vmatprep.subr.bf16.mxu0 0
      %1545 = vmatpush1.bf16.msra.mxu0 0
      %1546 = vmatprep.subr.bf16.mxu0 0
      %1547 = vmatpush1.bf16.msra.mxu0 0
      %1548 = vmatprep.subr.bf16.mxu0 0
      %1549 = vmatpush1.bf16.msra.mxu0 0
      %1550 = vmatprep.subr.bf16.mxu0 0
      %1551 = vmatpush1.bf16.msra.mxu0 0
      %1552 = vmatprep.subr.bf16.mxu0 0
      %1553 = vmatpush1.bf16.msra.mxu0 0
      %1554 = vmatprep.subr.bf16.mxu0 0
      %1555 = vmatpush1.bf16.msra.mxu0 0
      %1556 = vmatprep.mubr.bf16.mxu0 0
      %1557 = vmatmul.mubr.bf16.gmra.mrb[0].mxu0 %v1452
      %v1558 = vpop.f32.mrb[0].mxu0
      %v1559 = vadd.f32 %v1474, %v1558
      %v1560 = vpop.f32.mrb[0].mxu0
      %v1561 = vpop.f32.mrb[0].mxu0
      %v1562 = vpop.f32.mrb[0].mxu0
      %1563 = vdwg.mxu0
      %v1564 = vadd.f32 %v194, %v1559
      %1565 = vst [vmem:[#allocation23] sm:$0xff] %v1564
    $region121: #{tpu_custom_call.1} parent=1 // pred_fallthru
      _
    // Predicated region
    $region122: #{tpu_custom_call.1} parent=1 // pred_check
      _
    $region123: #{tpu_custom_call.1} parent=1 // pred_check_branch
      %1567 = sbr.rel (0) target = $region125
    $region124: #{tpu_custom_call.1} parent=1 // pred_region
      %s1569 = ssub.s32 128, 128
      %1570 = vsyncadd [#allocation7], %s1569
      %s1572 = sshll.u32 [#allocation22], 4
      %s1573 = int_to_ptr.vmem [resolvable:$true] %s1572
      %1575 = dma.vmem_to_hbm [thread:$0]  %s1573, 128, %s18, [#allocation7]
    $region125: #{tpu_custom_call.1} parent=1 // pred_fallthru
      _
    // Predicated region
    $region126: #{tpu_custom_call.1} parent=1 // pred_check
      _
    $region127: #{tpu_custom_call.1} parent=1 // pred_check_branch
      %1577 = sbr.rel (0) target = $region129
    $region128: #{tpu_custom_call.1} parent=1 // pred_region
      %s1579 = ssub.s32 128, 128
      %1580 = vsyncadd [#allocation24], %s1579
      %s1582 = sshll.u32 [#allocation23], 4
      %s1583 = int_to_ptr.vmem [resolvable:$true] %s1582
      %1585 = dma.vmem_to_hbm [thread:$0]  %s1583, 128, %s19, [#allocation24]
    $region129: #{tpu_custom_call.1} parent=1 // pred_fallthru
      _
    // Predicated region
    $region130: #{tpu_custom_call.1} parent=1 // pred_check
      _
    $region131: #{tpu_custom_call.1} parent=1 // pred_check_branch
      %1587 = sbr.rel (0) target = $region133
    $region132: #{tpu_custom_call.1} parent=1 // pred_region
      %1588 = dma.done [#allocation7], 128
    $region133: #{tpu_custom_call.1} parent=1 // pred_fallthru
      _
    // Predicated region
    $region134: #{tpu_custom_call.1} parent=1 // pred_check
      _
    $region135: #{tpu_custom_call.1} parent=1 // pred_check_branch
      %1590 = sbr.rel (0) target = $region137
    $region136: #{tpu_custom_call.1} parent=1 // pred_region
      %1591 = dma.done [#allocation24], 128
    $region137: #{tpu_custom_call.1} parent=1 // pred_fallthru
      _
    %1592 = vsyncpa [#allocation6], 1
    %1593 = vsyncpa [#allocation9], 1
    %1594 = vsyncpa [#allocation12], 1
    %1595 = vsyncpa [#allocation15], 1
    %1596 = vsyncpa [#allocation18], 1
    %1597 = vsyncpa [#allocation21], 1
    %1598 = vsyncpa [#allocation7], 1
    %1599 = vsyncpa [#allocation24], 1

</llo_original>
